<compile_context>
chip_gen: v6e
topology: v6e:2x2x1
jax: 0.10.0
libtpu: 0.0.40
codegen_flags: <defaults>
</compile_context>

<pallas_src>
import functools

import jax
import jax.numpy as jnp
from jax import lax
from jax.experimental import pallas as pl
from jax.experimental.pallas import tpu as pltpu


def _lstm_head_kernel(x_ref, wih_ref, whh_ref, b_ref, wo_ref, bo_ref,
                      out_ref, gx_ref, *, seq_len, batch, hidden):
    """Single-invocation LSTM recurrence + fused Linear head.

    x_ref   : (T*B, E)  bf16, time-major rows (rows [t*B, t*B+B) are step t)
    wih_ref : (E, 4H)   bf16   W_ih^T
    whh_ref : (H, 4H)   bf16   W_hh^T
    b_ref   : (1, 4H)   f32    b_ih + b_hh
    wo_ref  : (H, Opad) bf16   W_lin^T, zero-padded to lane-dense width
    bo_ref  : (1, Opad) f32    b_lin, zero-padded
    out_ref : (B, Opad) f32
    gx_ref  : (T*B, 4H) f32 VMEM scratch holding the precomputed input proj.

    Gate order follows PyTorch nn.LSTM: [i, f, g, o].
    """
    T, B, H = seq_len, batch, hidden

    # ---- Prologue: input projection for ALL timesteps in one wide matmul ----
    # (T*B, E) @ (E, 4H): uses T*B MXU rows instead of B, and removes half the
    # per-step serial MXU work plus the per-step bias add from the recurrence.
    gx_ref[...] = (
        jnp.dot(x_ref[...], wih_ref[...], preferred_element_type=jnp.float32)
        + b_ref[...])

    w_hh = whh_ref[...]  # (H, 4H) bf16, hoisted out of the loop

    # ---- Recurrence: only h @ W_hh per step; fully unrolled for the LLO ----
    def step(t, carry):
        h, c = carry
        row = pl.multiple_of(t * B, B)                      # aligned sublane start
        gates = gx_ref[pl.ds(row, B), :] + jnp.dot(
            h.astype(w_hh.dtype), w_hh, preferred_element_type=jnp.float32)
        i = jax.nn.sigmoid(gates[:, 0 * H:1 * H])           # gate math kept f32
        f = jax.nn.sigmoid(gates[:, 1 * H:2 * H])
        g = jnp.tanh(gates[:, 2 * H:3 * H])
        o = jax.nn.sigmoid(gates[:, 3 * H:4 * H])
        c = f * c + i * g
        h = o * jnp.tanh(c)
        return (h, c)

    h0 = jnp.zeros((B, H), jnp.float32)
    c0 = jnp.zeros((B, H), jnp.float32)
    h, _ = lax.fori_loop(0, T, step, (h0, c0), unroll=True)

    # ---- Fused Linear head on ht[-1]; lane-dense (Opad=128) store ----
    out_ref[...] = (
        jnp.dot(h.astype(wo_ref.dtype), wo_ref[...],
                preferred_element_type=jnp.float32)
        + bo_ref[...]).astype(out_ref.dtype)


def lstm_glove_forward(token_ids, lengths, params):
    """Pallas equivalent of LSTM_glove_vecs.forward(x, l).

    `lengths` is accepted for API parity but (like the PyTorch forward) unused.
    `params` holds PyTorch-layout weights; layout prep (transpose / bf16 cast /
    lane padding) happens here.
    """
    del lengths
    glove = params["embedding"]
    w_ih, w_hh = params["w_ih"], params["w_hh"]          # (4H, E), (4H, H)
    b_ih, b_hh = params["b_ih"], params["b_hh"]          # (4H,), (4H,)
    w_lin, b_lin = params["w_lin"], params["b_lin"]      # (O, H), (O,)

    # Embedding lookup (frozen glove table). Pure gather -> plain-JAX glue.
    emb = glove[token_ids].astype(jnp.float32)           # (B, T, E)
    # Dropout(0.2): identity under eval-mode semantics.
    # TODO(synk): training-mode dropout mask (pltpu.prng_*) not implemented.

    B, T, E = emb.shape
    H = w_hh.shape[1]
    O = w_lin.shape[0]
    O_pad = max(128, ((O + 127) // 128) * 128)           # lane-dense head output

    # Time-major, flattened to (T*B, E) so the kernel prologue is one matmul.
    # bf16 operands halve HBM/VMEM traffic and hit the native MXU input path
    # on v6e/v7x; accumulation stays f32.
    x2d = jnp.swapaxes(emb, 0, 1).reshape(T * B, E).astype(jnp.bfloat16)

    w_ih_t = w_ih.T.astype(jnp.bfloat16)                 # (E, 4H)
    w_hh_t = w_hh.T.astype(jnp.bfloat16)                 # (H, 4H)
    b = (b_ih + b_hh).astype(jnp.float32).reshape(1, 4 * H)
    w_out_t = jnp.zeros((H, O_pad), jnp.bfloat16).at[:, :O].set(
        w_lin.T.astype(jnp.bfloat16))                    # (H, O_pad)
    b_out = jnp.zeros((1, O_pad), jnp.float32).at[:, :O].set(
        b_lin.astype(jnp.float32))                       # (1, O_pad)

    kernel = functools.partial(_lstm_head_kernel, seq_len=T, batch=B, hidden=H)

    flops = 2 * T * B * (E + H) * 4 * H + 2 * B * H * O_pad
    bytes_accessed = (T * B * E * 2 + (E + H) * 4 * H * 2 + 4 * H * 4
                      + H * O_pad * 2 + O_pad * 4 + B * O_pad * 4)

    out_padded = pl.pallas_call(
        kernel,
        out_shape=jax.ShapeDtypeStruct((B, O_pad), jnp.float32),
        grid_spec=pltpu.PrefetchScalarGridSpec(
            num_scalar_prefetch=0,
            grid=(1,),                                   # whole recurrence in ONE invocation
            in_specs=[
                pl.BlockSpec((T * B, E), lambda i: (0, 0)),    # x, time-major (bf16)
                pl.BlockSpec((E, 4 * H), lambda i: (0, 0)),    # W_ih^T (bf16)
                pl.BlockSpec((H, 4 * H), lambda i: (0, 0)),    # W_hh^T (bf16)
                pl.BlockSpec((1, 4 * H), lambda i: (0, 0)),    # b_ih + b_hh (f32)
                pl.BlockSpec((H, O_pad), lambda i: (0, 0)),    # W_lin^T padded (bf16)
                pl.BlockSpec((1, O_pad), lambda i: (0, 0)),    # b_lin padded (f32)
            ],
            out_specs=pl.BlockSpec((B, O_pad), lambda i: (0, 0)),
            scratch_shapes=[pltpu.VMEM((T * B, 4 * H), jnp.float32)],  # gates_x
        ),
        compiler_params=pltpu.CompilerParams(
            dimension_semantics=("arbitrary",)),
        cost_estimate=pl.CostEstimate(
            flops=flops,
            transcendentals=5 * T * B * H,
            bytes_accessed=bytes_accessed),
    )(x2d, w_ih_t, w_hh_t, b, w_out_t, b_out)

    # NOTE(v7x): if B ever grows to ~128+, add a leading batch grid axis marked
    # "parallel" so both TensorCores run half the batch's recurrence.
    return out_padded[:, :O]


def reference_forward(token_ids, glove, w_ih, w_hh, b_ih, b_hh, w_lin, b_lin):
    """Pure-JAX f32 reference with PyTorch weight layouts (correctness check)."""
    x = glove[token_ids].astype(jnp.float32)
    B, T, E = x.shape
    H = w_hh.shape[1]

    def step(carry, x_t):
        h, c = carry
        gates = x_t @ w_ih.T + h @ w_hh.T + b_ih + b_hh
        i, f, g, o = jnp.split(gates, 4, axis=-1)
        i, f, g, o = jax.nn.sigmoid(i), jax.nn.sigmoid(f), jnp.tanh(g), jax.nn.sigmoid(o)
        c = f * c + i * g
        h = o * jnp.tanh(c)
        return (h, c), None

    (h, _), _ = lax.scan(step,
                         (jnp.zeros((B, H), jnp.float32), jnp.zeros((B, H), jnp.float32)),
                         jnp.swapaxes(x, 0, 1))
    return h @ w_lin.T + b_lin


if __name__ == "__main__":
    # Small deterministic setup consistent with the module's __init__.
    vocab_size, embedding_dim, hidden_dim, output_size = 50, 128, 128, 8
    B, T = 8, 8

    key = jax.random.PRNGKey(0)
    ks = jax.random.split(key, 8)
    glove = 0.1 * jax.random.normal(ks[0], (vocab_size, embedding_dim), jnp.float32)
    w_ih = 0.05 * jax.random.normal(ks[1], (4 * hidden_dim, embedding_dim), jnp.float32)
    w_hh = 0.05 * jax.random.normal(ks[2], (4 * hidden_dim, hidden_dim), jnp.float32)
    b_ih = 0.05 * jax.random.normal(ks[3], (4 * hidden_dim,), jnp.float32)
    b_hh = 0.05 * jax.random.normal(ks[4], (4 * hidden_dim,), jnp.float32)
    w_lin = 0.05 * jax.random.normal(ks[5], (output_size, hidden_dim), jnp.float32)
    b_lin = 0.05 * jax.random.normal(ks[6], (output_size,), jnp.float32)

    token_ids = jax.random.randint(ks[7], (B, T), 0, vocab_size, dtype=jnp.int32)
    lengths = jnp.full((B,), T, dtype=jnp.int32)   # unused by forward (parity with PyTorch)

    params = {
        "embedding": glove,
        "w_ih": w_ih, "w_hh": w_hh,
        "b_ih": b_ih, "b_hh": b_hh,
        "w_lin": w_lin, "b_lin": b_lin,
    }

    out = jax.block_until_ready(
        jax.jit(lstm_glove_forward)(token_ids, lengths, params))

    ref = reference_forward(token_ids, glove, w_ih, w_hh, b_ih, b_hh, w_lin, b_lin)
    assert out.shape == (B, output_size)
    # bf16 MXU operands (per perf review) vs the f32 reference -> looser tolerance.
    assert jnp.allclose(out, ref, atol=1e-2, rtol=1e-2), "mismatch vs JAX reference"

    print("KERNEL_OK")
</pallas_src>

<mosaic_0001>
module attributes {stable_mosaic.version = 11 : i64} {
  func.func @_lstm_head_kernel(%arg0: i32, %arg1: memref<64x128xbf16, #tpu.memory_space<vmem>>, %arg2: memref<128x512xbf16, #tpu.memory_space<vmem>>, %arg3: memref<128x512xbf16, #tpu.memory_space<vmem>>, %arg4: memref<1x512xf32, #tpu.memory_space<vmem>>, %arg5: memref<128x128xbf16, #tpu.memory_space<vmem>>, %arg6: memref<1x128xf32, #tpu.memory_space<vmem>>, %arg7: memref<8x128xf32, #tpu.memory_space<vmem>>, %arg8: memref<64x512xf32, #tpu.memory_space<vmem>>) attributes {dimension_semantics = [#tpu.dimension_semantics<arbitrary>], iteration_bounds = array<i64: 1>, scalar_prefetch = 0 : i64, scratch_operands = 1 : i64, tpu.core_type = #tpu.core_type<tc>, window_params = [{pipeline_mode = #tpu.pipeline_mode<synchronous>, transform_indices = @transform_0, window_bounds = array<i64: 64, 128>}, {pipeline_mode = #tpu.pipeline_mode<synchronous>, transform_indices = @transform_1, window_bounds = array<i64: 128, 512>}, {pipeline_mode = #tpu.pipeline_mode<synchronous>, transform_indices = @transform_2, window_bounds = array<i64: 128, 512>}, {pipeline_mode = #tpu.pipeline_mode<synchronous>, transform_indices = @transform_3, window_bounds = array<i64: 1, 512>}, {pipeline_mode = #tpu.pipeline_mode<synchronous>, transform_indices = @transform_4, window_bounds = array<i64: 128, 128>}, {pipeline_mode = #tpu.pipeline_mode<synchronous>, transform_indices = @transform_5, window_bounds = array<i64: 1, 128>}, {pipeline_mode = #tpu.pipeline_mode<synchronous>, transform_indices = @transform_6, window_bounds = array<i64: 8, 128>}]} {
    %c0 = arith.constant 0 : index
    %c0_0 = arith.constant 0 : index
    %0 = vector.load %arg1[%c0, %c0_0] : memref<64x128xbf16, #tpu.memory_space<vmem>>, vector<64x128xbf16>
    %c0_1 = arith.constant 0 : index
    %c0_2 = arith.constant 0 : index
    %1 = vector.load %arg2[%c0_1, %c0_2] : memref<128x512xbf16, #tpu.memory_space<vmem>>, vector<128x512xbf16>
    %cst = arith.constant dense<0.000000e+00> : vector<64x512xf32>
    %2 = tpu.matmul %0, %1, %cst {dimension_numbers = #tpu.dot_dimension_numbers<[1], [0], [0], [1], [0, 0, 1, 1], [], []>} : vector<64x128xbf16>, vector<128x512xbf16>, vector<64x512xf32> -> vector<64x512xf32>
    %c0_3 = arith.constant 0 : index
    %c0_4 = arith.constant 0 : index
    %3 = vector.load %arg4[%c0_3, %c0_4] : memref<1x512xf32, #tpu.memory_space<vmem>>, vector<1x512xf32>
    %4 = vector.broadcast %3 : vector<1x512xf32> to vector<64x512xf32>
    %5 = arith.addf %2, %4 : vector<64x512xf32>
    %c0_5 = arith.constant 0 : index
    %c0_6 = arith.constant 0 : index
    %6 = vector.load %arg8[%c0_5, %c0_6] : memref<64x512xf32, #tpu.memory_space<vmem>>, vector<64x512xf32>
    tpu.vector_store %arg8[%c0_5, %c0_6], %5 {strides = array<i32>} : memref<64x512xf32, #tpu.memory_space<vmem>>, vector<64x512xf32>,
    %c0_7 = arith.constant 0 : index
    %c0_8 = arith.constant 0 : index
    %7 = vector.load %arg3[%c0_7, %c0_8] : memref<128x512xbf16, #tpu.memory_space<vmem>>, vector<128x512xbf16>
    %cst_9 = arith.constant 0.000000e+00 : f32
    %8 = vector.broadcast %cst_9 : f32 to vector<8x128xf32>
    %cst_10 = arith.constant 0.000000e+00 : f32
    %9 = vector.broadcast %cst_10 : f32 to vector<8x128xf32>
    %c0_i32 = arith.constant 0 : i32
    %c8_i32 = arith.constant 8 : i32
    %10 = arith.muli %c0_i32, %c8_i32 : i32
    %11 = tpu.assume_multiple %10, 8 : i32
    %12 = arith.index_cast %11 : i32 to index
    %c0_11 = arith.constant 0 : index
    %13 = vector.load %arg8[%12, %c0_11] : memref<64x512xf32, #tpu.memory_space<vmem>>, vector<8x512xf32>
    %14 = arith.truncf %8 : vector<8x128xf32> to vector<8x128xbf16>
    %cst_12 = arith.constant dense<0.000000e+00> : vector<8x512xf32>
    %15 = tpu.matmul %14, %7, %cst_12 {dimension_numbers = #tpu.dot_dimension_numbers<[1], [0], [0], [1], [0, 0, 1, 1], [], []>} : vector<8x128xbf16>, vector<128x512xbf16>, vector<8x512xf32> -> vector<8x512xf32>
    %16 = arith.addf %13, %15 : vector<8x512xf32>
    %17 = vector.extract_strided_slice %16 {offsets = [0, 0], sizes = [8, 128], strides = [1, 1]} : vector<8x512xf32> to vector<8x128xf32>
    %18 = arith.negf %17 : vector<8x128xf32>
    %19 = math.exp %18 : vector<8x128xf32>
    %cst_13 = arith.constant 1.000000e+00 : f32
    %20 = vector.broadcast %cst_13 : f32 to vector<8x128xf32>
    %21 = arith.addf %20, %19 : vector<8x128xf32>
    %22 = arith.divf %20, %21 : vector<8x128xf32>
    %23 = vector.extract_strided_slice %16 {offsets = [0, 128], sizes = [8, 128], strides = [1, 1]} : vector<8x512xf32> to vector<8x128xf32>
    %24 = arith.negf %23 : vector<8x128xf32>
    %25 = math.exp %24 : vector<8x128xf32>
    %cst_14 = arith.constant 1.000000e+00 : f32
    %26 = vector.broadcast %cst_14 : f32 to vector<8x128xf32>
    %27 = arith.addf %26, %25 : vector<8x128xf32>
    %28 = arith.divf %26, %27 : vector<8x128xf32>
    %29 = vector.extract_strided_slice %16 {offsets = [0, 256], sizes = [8, 128], strides = [1, 1]} : vector<8x512xf32> to vector<8x128xf32>
    %30 = math.tanh %29 : vector<8x128xf32>
    %31 = vector.extract_strided_slice %16 {offsets = [0, 384], sizes = [8, 128], strides = [1, 1]} : vector<8x512xf32> to vector<8x128xf32>
    %32 = arith.negf %31 : vector<8x128xf32>
    %33 = math.exp %32 : vector<8x128xf32>
    %cst_15 = arith.constant 1.000000e+00 : f32
    %34 = vector.broadcast %cst_15 : f32 to vector<8x128xf32>
    %35 = arith.addf %34, %33 : vector<8x128xf32>
    %36 = arith.divf %34, %35 : vector<8x128xf32>
    %37 = arith.mulf %28, %9 : vector<8x128xf32>
    %38 = arith.mulf %22, %30 : vector<8x128xf32>
    %39 = arith.addf %37, %38 : vector<8x128xf32>
    %40 = math.tanh %39 : vector<8x128xf32>
    %41 = arith.mulf %36, %40 : vector<8x128xf32>
    %c1_i32 = arith.constant 1 : i32
    %c8_i32_16 = arith.constant 8 : i32
    %42 = arith.muli %c1_i32, %c8_i32_16 : i32
    %43 = tpu.assume_multiple %42, 8 : i32
    %44 = arith.index_cast %43 : i32 to index
    %c0_17 = arith.constant 0 : index
    %45 = vector.load %arg8[%44, %c0_17] : memref<64x512xf32, #tpu.memory_space<vmem>>, vector<8x512xf32>
    %46 = arith.truncf %41 : vector<8x128xf32> to vector<8x128xbf16>
    %cst_18 = arith.constant dense<0.000000e+00> : vector<8x512xf32>
    %47 = tpu.matmul %46, %7, %cst_18 {dimension_numbers = #tpu.dot_dimension_numbers<[1], [0], [0], [1], [0, 0, 1, 1], [], []>} : vector<8x128xbf16>, vector<128x512xbf16>, vector<8x512xf32> -> vector<8x512xf32>
    %48 = arith.addf %45, %47 : vector<8x512xf32>
    %49 = vector.extract_strided_slice %48 {offsets = [0, 0], sizes = [8, 128], strides = [1, 1]} : vector<8x512xf32> to vector<8x128xf32>
    %50 = arith.negf %49 : vector<8x128xf32>
    %51 = math.exp %50 : vector<8x128xf32>
    %cst_19 = arith.constant 1.000000e+00 : f32
    %52 = vector.broadcast %cst_19 : f32 to vector<8x128xf32>
    %53 = arith.addf %52, %51 : vector<8x128xf32>
    %54 = arith.divf %52, %53 : vector<8x128xf32>
    %55 = vector.extract_strided_slice %48 {offsets = [0, 128], sizes = [8, 128], strides = [1, 1]} : vector<8x512xf32> to vector<8x128xf32>
    %56 = arith.negf %55 : vector<8x128xf32>
    %57 = math.exp %56 : vector<8x128xf32>
    %cst_20 = arith.constant 1.000000e+00 : f32
    %58 = vector.broadcast %cst_20 : f32 to vector<8x128xf32>
    %59 = arith.addf %58, %57 : vector<8x128xf32>
    %60 = arith.divf %58, %59 : vector<8x128xf32>
    %61 = vector.extract_strided_slice %48 {offsets = [0, 256], sizes = [8, 128], strides = [1, 1]} : vector<8x512xf32> to vector<8x128xf32>
    %62 = math.tanh %61 : vector<8x128xf32>
    %63 = vector.extract_strided_slice %48 {offsets = [0, 384], sizes = [8, 128], strides = [1, 1]} : vector<8x512xf32> to vector<8x128xf32>
    %64 = arith.negf %63 : vector<8x128xf32>
    %65 = math.exp %64 : vector<8x128xf32>
    %cst_21 = arith.constant 1.000000e+00 : f32
    %66 = vector.broadcast %cst_21 : f32 to vector<8x128xf32>
    %67 = arith.addf %66, %65 : vector<8x128xf32>
    %68 = arith.divf %66, %67 : vector<8x128xf32>
    %69 = arith.mulf %60, %39 : vector<8x128xf32>
    %70 = arith.mulf %54, %62 : vector<8x128xf32>
    %71 = arith.addf %69, %70 : vector<8x128xf32>
    %72 = math.tanh %71 : vector<8x128xf32>
    %73 = arith.mulf %68, %72 : vector<8x128xf32>
    %c2_i32 = arith.constant 2 : i32
    %c8_i32_22 = arith.constant 8 : i32
    %74 = arith.muli %c2_i32, %c8_i32_22 : i32
    %75 = tpu.assume_multiple %74, 8 : i32
    %76 = arith.index_cast %75 : i32 to index
    %c0_23 = arith.constant 0 : index
    %77 = vector.load %arg8[%76, %c0_23] : memref<64x512xf32, #tpu.memory_space<vmem>>, vector<8x512xf32>
    %78 = arith.truncf %73 : vector<8x128xf32> to vector<8x128xbf16>
    %cst_24 = arith.constant dense<0.000000e+00> : vector<8x512xf32>
    %79 = tpu.matmul %78, %7, %cst_24 {dimension_numbers = #tpu.dot_dimension_numbers<[1], [0], [0], [1], [0, 0, 1, 1], [], []>} : vector<8x128xbf16>, vector<128x512xbf16>, vector<8x512xf32> -> vector<8x512xf32>
    %80 = arith.addf %77, %79 : vector<8x512xf32>
    %81 = vector.extract_strided_slice %80 {offsets = [0, 0], sizes = [8, 128], strides = [1, 1]} : vector<8x512xf32> to vector<8x128xf32>
    %82 = arith.negf %81 : vector<8x128xf32>
    %83 = math.exp %82 : vector<8x128xf32>
    %cst_25 = arith.constant 1.000000e+00 : f32
    %84 = vector.broadcast %cst_25 : f32 to vector<8x128xf32>
    %85 = arith.addf %84, %83 : vector<8x128xf32>
    %86 = arith.divf %84, %85 : vector<8x128xf32>
    %87 = vector.extract_strided_slice %80 {offsets = [0, 128], sizes = [8, 128], strides = [1, 1]} : vector<8x512xf32> to vector<8x128xf32>
    %88 = arith.negf %87 : vector<8x128xf32>
    %89 = math.exp %88 : vector<8x128xf32>
    %cst_26 = arith.constant 1.000000e+00 : f32
    %90 = vector.broadcast %cst_26 : f32 to vector<8x128xf32>
    %91 = arith.addf %90, %89 : vector<8x128xf32>
    %92 = arith.divf %90, %91 : vector<8x128xf32>
    %93 = vector.extract_strided_slice %80 {offsets = [0, 256], sizes = [8, 128], strides = [1, 1]} : vector<8x512xf32> to vector<8x128xf32>
    %94 = math.tanh %93 : vector<8x128xf32>
    %95 = vector.extract_strided_slice %80 {offsets = [0, 384], sizes = [8, 128], strides = [1, 1]} : vector<8x512xf32> to vector<8x128xf32>
    %96 = arith.negf %95 : vector<8x128xf32>
    %97 = math.exp %96 : vector<8x128xf32>
    %cst_27 = arith.constant 1.000000e+00 : f32
    %98 = vector.broadcast %cst_27 : f32 to vector<8x128xf32>
    %99 = arith.addf %98, %97 : vector<8x128xf32>
    %100 = arith.divf %98, %99 : vector<8x128xf32>
    %101 = arith.mulf %92, %71 : vector<8x128xf32>
    %102 = arith.mulf %86, %94 : vector<8x128xf32>
    %103 = arith.addf %101, %102 : vector<8x128xf32>
    %104 = math.tanh %103 : vector<8x128xf32>
    %105 = arith.mulf %100, %104 : vector<8x128xf32>
    %c3_i32 = arith.constant 3 : i32
    %c8_i32_28 = arith.constant 8 : i32
    %106 = arith.muli %c3_i32, %c8_i32_28 : i32
    %107 = tpu.assume_multiple %106, 8 : i32
    %108 = arith.index_cast %107 : i32 to index
    %c0_29 = arith.constant 0 : index
    %109 = vector.load %arg8[%108, %c0_29] : memref<64x512xf32, #tpu.memory_space<vmem>>, vector<8x512xf32>
    %110 = arith.truncf %105 : vector<8x128xf32> to vector<8x128xbf16>
    %cst_30 = arith.constant dense<0.000000e+00> : vector<8x512xf32>
    %111 = tpu.matmul %110, %7, %cst_30 {dimension_numbers = #tpu.dot_dimension_numbers<[1], [0], [0], [1], [0, 0, 1, 1], [], []>} : vector<8x128xbf16>, vector<128x512xbf16>, vector<8x512xf32> -> vector<8x512xf32>
    %112 = arith.addf %109, %111 : vector<8x512xf32>
    %113 = vector.extract_strided_slice %112 {offsets = [0, 0], sizes = [8, 128], strides = [1, 1]} : vector<8x512xf32> to vector<8x128xf32>
    %114 = arith.negf %113 : vector<8x128xf32>
    %115 = math.exp %114 : vector<8x128xf32>
    %cst_31 = arith.constant 1.000000e+00 : f32
    %116 = vector.broadcast %cst_31 : f32 to vector<8x128xf32>
    %117 = arith.addf %116, %115 : vector<8x128xf32>
    %118 = arith.divf %116, %117 : vector<8x128xf32>
    %119 = vector.extract_strided_slice %112 {offsets = [0, 128], sizes = [8, 128], strides = [1, 1]} : vector<8x512xf32> to vector<8x128xf32>
    %120 = arith.negf %119 : vector<8x128xf32>
    %121 = math.exp %120 : vector<8x128xf32>
    %cst_32 = arith.constant 1.000000e+00 : f32
    %122 = vector.broadcast %cst_32 : f32 to vector<8x128xf32>
    %123 = arith.addf %122, %121 : vector<8x128xf32>
    %124 = arith.divf %122, %123 : vector<8x128xf32>
    %125 = vector.extract_strided_slice %112 {offsets = [0, 256], sizes = [8, 128], strides = [1, 1]} : vector<8x512xf32> to vector<8x128xf32>
    %126 = math.tanh %125 : vector<8x128xf32>
    %127 = vector.extract_strided_slice %112 {offsets = [0, 384], sizes = [8, 128], strides = [1, 1]} : vector<8x512xf32> to vector<8x128xf32>
    %128 = arith.negf %127 : vector<8x128xf32>
    %129 = math.exp %128 : vector<8x128xf32>
    %cst_33 = arith.constant 1.000000e+00 : f32
    %130 = vector.broadcast %cst_33 : f32 to vector<8x128xf32>
    %131 = arith.addf %130, %129 : vector<8x128xf32>
    %132 = arith.divf %130, %131 : vector<8x128xf32>
    %133 = arith.mulf %124, %103 : vector<8x128xf32>
    %134 = arith.mulf %118, %126 : vector<8x128xf32>
    %135 = arith.addf %133, %134 : vector<8x128xf32>
    %136 = math.tanh %135 : vector<8x128xf32>
    %137 = arith.mulf %132, %136 : vector<8x128xf32>
    %c4_i32 = arith.constant 4 : i32
    %c8_i32_34 = arith.constant 8 : i32
    %138 = arith.muli %c4_i32, %c8_i32_34 : i32
    %139 = tpu.assume_multiple %138, 8 : i32
    %140 = arith.index_cast %139 : i32 to index
    %c0_35 = arith.constant 0 : index
    %141 = vector.load %arg8[%140, %c0_35] : memref<64x512xf32, #tpu.memory_space<vmem>>, vector<8x512xf32>
    %142 = arith.truncf %137 : vector<8x128xf32> to vector<8x128xbf16>
    %cst_36 = arith.constant dense<0.000000e+00> : vector<8x512xf32>
    %143 = tpu.matmul %142, %7, %cst_36 {dimension_numbers = #tpu.dot_dimension_numbers<[1], [0], [0], [1], [0, 0, 1, 1], [], []>} : vector<8x128xbf16>, vector<128x512xbf16>, vector<8x512xf32> -> vector<8x512xf32>
    %144 = arith.addf %141, %143 : vector<8x512xf32>
    %145 = vector.extract_strided_slice %144 {offsets = [0, 0], sizes = [8, 128], strides = [1, 1]} : vector<8x512xf32> to vector<8x128xf32>
    %146 = arith.negf %145 : vector<8x128xf32>
    %147 = math.exp %146 : vector<8x128xf32>
    %cst_37 = arith.constant 1.000000e+00 : f32
    %148 = vector.broadcast %cst_37 : f32 to vector<8x128xf32>
    %149 = arith.addf %148, %147 : vector<8x128xf32>
    %150 = arith.divf %148, %149 : vector<8x128xf32>
    %151 = vector.extract_strided_slice %144 {offsets = [0, 128], sizes = [8, 128], strides = [1, 1]} : vector<8x512xf32> to vector<8x128xf32>
    %152 = arith.negf %151 : vector<8x128xf32>
    %153 = math.exp %152 : vector<8x128xf32>
    %cst_38 = arith.constant 1.000000e+00 : f32
    %154 = vector.broadcast %cst_38 : f32 to vector<8x128xf32>
    %155 = arith.addf %154, %153 : vector<8x128xf32>
    %156 = arith.divf %154, %155 : vector<8x128xf32>
    %157 = vector.extract_strided_slice %144 {offsets = [0, 256], sizes = [8, 128], strides = [1, 1]} : vector<8x512xf32> to vector<8x128xf32>
    %158 = math.tanh %157 : vector<8x128xf32>
    %159 = vector.extract_strided_slice %144 {offsets = [0, 384], sizes = [8, 128], strides = [1, 1]} : vector<8x512xf32> to vector<8x128xf32>
    %160 = arith.negf %159 : vector<8x128xf32>
    %161 = math.exp %160 : vector<8x128xf32>
    %cst_39 = arith.constant 1.000000e+00 : f32
    %162 = vector.broadcast %cst_39 : f32 to vector<8x128xf32>
    %163 = arith.addf %162, %161 : vector<8x128xf32>
    %164 = arith.divf %162, %163 : vector<8x128xf32>
    %165 = arith.mulf %156, %135 : vector<8x128xf32>
    %166 = arith.mulf %150, %158 : vector<8x128xf32>
    %167 = arith.addf %165, %166 : vector<8x128xf32>
    %168 = math.tanh %167 : vector<8x128xf32>
    %169 = arith.mulf %164, %168 : vector<8x128xf32>
    %c5_i32 = arith.constant 5 : i32
    %c8_i32_40 = arith.constant 8 : i32
    %170 = arith.muli %c5_i32, %c8_i32_40 : i32
    %171 = tpu.assume_multiple %170, 8 : i32
    %172 = arith.index_cast %171 : i32 to index
    %c0_41 = arith.constant 0 : index
    %173 = vector.load %arg8[%172, %c0_41] : memref<64x512xf32, #tpu.memory_space<vmem>>, vector<8x512xf32>
    %174 = arith.truncf %169 : vector<8x128xf32> to vector<8x128xbf16>
    %cst_42 = arith.constant dense<0.000000e+00> : vector<8x512xf32>
    %175 = tpu.matmul %174, %7, %cst_42 {dimension_numbers = #tpu.dot_dimension_numbers<[1], [0], [0], [1], [0, 0, 1, 1], [], []>} : vector<8x128xbf16>, vector<128x512xbf16>, vector<8x512xf32> -> vector<8x512xf32>
    %176 = arith.addf %173, %175 : vector<8x512xf32>
    %177 = vector.extract_strided_slice %176 {offsets = [0, 0], sizes = [8, 128], strides = [1, 1]} : vector<8x512xf32> to vector<8x128xf32>
    %178 = arith.negf %177 : vector<8x128xf32>
    %179 = math.exp %178 : vector<8x128xf32>
    %cst_43 = arith.constant 1.000000e+00 : f32
    %180 = vector.broadcast %cst_43 : f32 to vector<8x128xf32>
    %181 = arith.addf %180, %179 : vector<8x128xf32>
    %182 = arith.divf %180, %181 : vector<8x128xf32>
    %183 = vector.extract_strided_slice %176 {offsets = [0, 128], sizes = [8, 128], strides = [1, 1]} : vector<8x512xf32> to vector<8x128xf32>
    %184 = arith.negf %183 : vector<8x128xf32>
    %185 = math.exp %184 : vector<8x128xf32>
    %cst_44 = arith.constant 1.000000e+00 : f32
    %186 = vector.broadcast %cst_44 : f32 to vector<8x128xf32>
    %187 = arith.addf %186, %185 : vector<8x128xf32>
    %188 = arith.divf %186, %187 : vector<8x128xf32>
    %189 = vector.extract_strided_slice %176 {offsets = [0, 256], sizes = [8, 128], strides = [1, 1]} : vector<8x512xf32> to vector<8x128xf32>
    %190 = math.tanh %189 : vector<8x128xf32>
    %191 = vector.extract_strided_slice %176 {offsets = [0, 384], sizes = [8, 128], strides = [1, 1]} : vector<8x512xf32> to vector<8x128xf32>
    %192 = arith.negf %191 : vector<8x128xf32>
    %193 = math.exp %192 : vector<8x128xf32>
    %cst_45 = arith.constant 1.000000e+00 : f32
    %194 = vector.broadcast %cst_45 : f32 to vector<8x128xf32>
    %195 = arith.addf %194, %193 : vector<8x128xf32>
    %196 = arith.divf %194, %195 : vector<8x128xf32>
    %197 = arith.mulf %188, %167 : vector<8x128xf32>
    %198 = arith.mulf %182, %190 : vector<8x128xf32>
    %199 = arith.addf %197, %198 : vector<8x128xf32>
    %200 = math.tanh %199 : vector<8x128xf32>
    %201 = arith.mulf %196, %200 : vector<8x128xf32>
    %c6_i32 = arith.constant 6 : i32
    %c8_i32_46 = arith.constant 8 : i32
    %202 = arith.muli %c6_i32, %c8_i32_46 : i32
    %203 = tpu.assume_multiple %202, 8 : i32
    %204 = arith.index_cast %203 : i32 to index
    %c0_47 = arith.constant 0 : index
    %205 = vector.load %arg8[%204, %c0_47] : memref<64x512xf32, #tpu.memory_space<vmem>>, vector<8x512xf32>
    %206 = arith.truncf %201 : vector<8x128xf32> to vector<8x128xbf16>
    %cst_48 = arith.constant dense<0.000000e+00> : vector<8x512xf32>
    %207 = tpu.matmul %206, %7, %cst_48 {dimension_numbers = #tpu.dot_dimension_numbers<[1], [0], [0], [1], [0, 0, 1, 1], [], []>} : vector<8x128xbf16>, vector<128x512xbf16>, vector<8x512xf32> -> vector<8x512xf32>
    %208 = arith.addf %205, %207 : vector<8x512xf32>
    %209 = vector.extract_strided_slice %208 {offsets = [0, 0], sizes = [8, 128], strides = [1, 1]} : vector<8x512xf32> to vector<8x128xf32>
    %210 = arith.negf %209 : vector<8x128xf32>
    %211 = math.exp %210 : vector<8x128xf32>
    %cst_49 = arith.constant 1.000000e+00 : f32
    %212 = vector.broadcast %cst_49 : f32 to vector<8x128xf32>
    %213 = arith.addf %212, %211 : vector<8x128xf32>
    %214 = arith.divf %212, %213 : vector<8x128xf32>
    %215 = vector.extract_strided_slice %208 {offsets = [0, 128], sizes = [8, 128], strides = [1, 1]} : vector<8x512xf32> to vector<8x128xf32>
    %216 = arith.negf %215 : vector<8x128xf32>
    %217 = math.exp %216 : vector<8x128xf32>
    %cst_50 = arith.constant 1.000000e+00 : f32
    %218 = vector.broadcast %cst_50 : f32 to vector<8x128xf32>
    %219 = arith.addf %218, %217 : vector<8x128xf32>
    %220 = arith.divf %218, %219 : vector<8x128xf32>
    %221 = vector.extract_strided_slice %208 {offsets = [0, 256], sizes = [8, 128], strides = [1, 1]} : vector<8x512xf32> to vector<8x128xf32>
    %222 = math.tanh %221 : vector<8x128xf32>
    %223 = vector.extract_strided_slice %208 {offsets = [0, 384], sizes = [8, 128], strides = [1, 1]} : vector<8x512xf32> to vector<8x128xf32>
    %224 = arith.negf %223 : vector<8x128xf32>
    %225 = math.exp %224 : vector<8x128xf32>
    %cst_51 = arith.constant 1.000000e+00 : f32
    %226 = vector.broadcast %cst_51 : f32 to vector<8x128xf32>
    %227 = arith.addf %226, %225 : vector<8x128xf32>
    %228 = arith.divf %226, %227 : vector<8x128xf32>
    %229 = arith.mulf %220, %199 : vector<8x128xf32>
    %230 = arith.mulf %214, %222 : vector<8x128xf32>
    %231 = arith.addf %229, %230 : vector<8x128xf32>
    %232 = math.tanh %231 : vector<8x128xf32>
    %233 = arith.mulf %228, %232 : vector<8x128xf32>
    %c7_i32 = arith.constant 7 : i32
    %c8_i32_52 = arith.constant 8 : i32
    %234 = arith.muli %c7_i32, %c8_i32_52 : i32
    %235 = tpu.assume_multiple %234, 8 : i32
    %236 = arith.index_cast %235 : i32 to index
    %c0_53 = arith.constant 0 : index
    %237 = vector.load %arg8[%236, %c0_53] : memref<64x512xf32, #tpu.memory_space<vmem>>, vector<8x512xf32>
    %238 = arith.truncf %233 : vector<8x128xf32> to vector<8x128xbf16>
    %cst_54 = arith.constant dense<0.000000e+00> : vector<8x512xf32>
    %239 = tpu.matmul %238, %7, %cst_54 {dimension_numbers = #tpu.dot_dimension_numbers<[1], [0], [0], [1], [0, 0, 1, 1], [], []>} : vector<8x128xbf16>, vector<128x512xbf16>, vector<8x512xf32> -> vector<8x512xf32>
    %240 = arith.addf %237, %239 : vector<8x512xf32>
    %241 = vector.extract_strided_slice %240 {offsets = [0, 0], sizes = [8, 128], strides = [1, 1]} : vector<8x512xf32> to vector<8x128xf32>
    %242 = arith.negf %241 : vector<8x128xf32>
    %243 = math.exp %242 : vector<8x128xf32>
    %cst_55 = arith.constant 1.000000e+00 : f32
    %244 = vector.broadcast %cst_55 : f32 to vector<8x128xf32>
    %245 = arith.addf %244, %243 : vector<8x128xf32>
    %246 = arith.divf %244, %245 : vector<8x128xf32>
    %247 = vector.extract_strided_slice %240 {offsets = [0, 128], sizes = [8, 128], strides = [1, 1]} : vector<8x512xf32> to vector<8x128xf32>
    %248 = arith.negf %247 : vector<8x128xf32>
    %249 = math.exp %248 : vector<8x128xf32>
    %cst_56 = arith.constant 1.000000e+00 : f32
    %250 = vector.broadcast %cst_56 : f32 to vector<8x128xf32>
    %251 = arith.addf %250, %249 : vector<8x128xf32>
    %252 = arith.divf %250, %251 : vector<8x128xf32>
    %253 = vector.extract_strided_slice %240 {offsets = [0, 256], sizes = [8, 128], strides = [1, 1]} : vector<8x512xf32> to vector<8x128xf32>
    %254 = math.tanh %253 : vector<8x128xf32>
    %255 = vector.extract_strided_slice %240 {offsets = [0, 384], sizes = [8, 128], strides = [1, 1]} : vector<8x512xf32> to vector<8x128xf32>
    %256 = arith.negf %255 : vector<8x128xf32>
    %257 = math.exp %256 : vector<8x128xf32>
    %cst_57 = arith.constant 1.000000e+00 : f32
    %258 = vector.broadcast %cst_57 : f32 to vector<8x128xf32>
    %259 = arith.addf %258, %257 : vector<8x128xf32>
    %260 = arith.divf %258, %259 : vector<8x128xf32>
    %261 = arith.mulf %252, %231 : vector<8x128xf32>
    %262 = arith.mulf %246, %254 : vector<8x128xf32>
    %263 = arith.addf %261, %262 : vector<8x128xf32>
    %264 = math.tanh %263 : vector<8x128xf32>
    %265 = arith.mulf %260, %264 : vector<8x128xf32>
    %c8_i32_58 = arith.constant 8 : i32
    %266 = arith.truncf %265 : vector<8x128xf32> to vector<8x128xbf16>
    %c0_59 = arith.constant 0 : index
    %c0_60 = arith.constant 0 : index
    %267 = vector.load %arg5[%c0_59, %c0_60] : memref<128x128xbf16, #tpu.memory_space<vmem>>, vector<128x128xbf16>
    %cst_61 = arith.constant dense<0.000000e+00> : vector<8x128xf32>
    %268 = tpu.matmul %266, %267, %cst_61 {dimension_numbers = #tpu.dot_dimension_numbers<[1], [0], [0], [1], [0, 0, 1, 1], [], []>} : vector<8x128xbf16>, vector<128x128xbf16>, vector<8x128xf32> -> vector<8x128xf32>
    %c0_62 = arith.constant 0 : index
    %c0_63 = arith.constant 0 : index
    %269 = vector.load %arg6[%c0_62, %c0_63] : memref<1x128xf32, #tpu.memory_space<vmem>>, vector<1x128xf32>
    %270 = vector.broadcast %269 : vector<1x128xf32> to vector<8x128xf32>
    %271 = arith.addf %268, %270 : vector<8x128xf32>
    %c0_64 = arith.constant 0 : index
    %c0_65 = arith.constant 0 : index
    %272 = vector.load %arg7[%c0_64, %c0_65] : memref<8x128xf32, #tpu.memory_space<vmem>>, vector<8x128xf32>
    tpu.vector_store %arg7[%c0_64, %c0_65], %271 {strides = array<i32>} : memref<8x128xf32, #tpu.memory_space<vmem>>, vector<8x128xf32>,
    return
  }
  func.func @transform_0(%arg0: i32) -> (i32, i32) {
    %c0_i32 = arith.constant 0 : i32
    %c0_i32_0 = arith.constant 0 : i32
    %c0_i32_1 = arith.constant 0 : i32
    return %c0_i32, %c0_i32_0 : i32, i32
  }
  func.func @transform_1(%arg0: i32) -> (i32, i32) {
    %c0_i32 = arith.constant 0 : i32
    %c0_i32_0 = arith.constant 0 : i32
    %c0_i32_1 = arith.constant 0 : i32
    return %c0_i32, %c0_i32_0 : i32, i32
  }
  func.func @transform_2(%arg0: i32) -> (i32, i32) {
    %c0_i32 = arith.constant 0 : i32
    %c0_i32_0 = arith.constant 0 : i32
    %c0_i32_1 = arith.constant 0 : i32
    return %c0_i32, %c0_i32_0 : i32, i32
  }
  func.func @transform_3(%arg0: i32) -> (i32, i32) {
    %c0_i32 = arith.constant 0 : i32
    %c0_i32_0 = arith.constant 0 : i32
    %c0_i32_1 = arith.constant 0 : i32
    return %c0_i32, %c0_i32_0 : i32, i32
  }
  func.func @transform_4(%arg0: i32) -> (i32, i32) {
    %c0_i32 = arith.constant 0 : i32
    %c0_i32_0 = arith.constant 0 : i32
    %c0_i32_1 = arith.constant 0 : i32
    return %c0_i32, %c0_i32_0 : i32, i32
  }
  func.func @transform_5(%arg0: i32) -> (i32, i32) {
    %c0_i32 = arith.constant 0 : i32
    %c0_i32_0 = arith.constant 0 : i32
    %c0_i32_1 = arith.constant 0 : i32
    return %c0_i32, %c0_i32_0 : i32, i32
  }
  func.func @transform_6(%arg0: i32) -> (i32, i32) {
    %c0_i32 = arith.constant 0 : i32
    %c0_i32_0 = arith.constant 0 : i32
    %c0_i32_1 = arith.constant 0 : i32
    return %c0_i32, %c0_i32_0 : i32, i32
  }
}

</mosaic_0001>

<llo_original>
// kernel: lstm_glove_forward.1
$region0: #{lstm_glove_forward.1}
  #allocation0 [shape = 'u32[]', space=smem, size = 0x4, offset = 0x4, fixed_abs, tag = 'smem constant byte address 0x4 - core index']
  #allocation1 [shape = 'u32[144,128]{1,0:T(1,128)}', space=vmem, size = 0x12000, scoped, tag = 'internal scratch']
  #allocation2 [shape = 'f32[64,512]{1,0:T(8,128)}', space=vmem, size = 0x20000, scoped, tag = 'scratch operand']
  %s0 = inlined_call_operand.vmem [shape: bf16[64,128], index: 0, kind: input, shape index: {}]
  %s1 = inlined_call_operand.vmem [shape: bf16[128,512], index: 1, kind: input, shape index: {}]
  %s2 = inlined_call_operand.vmem [shape: bf16[128,512], index: 2, kind: input, shape index: {}]
  %s3 = inlined_call_operand.vmem [shape: f32[1,512], index: 3, kind: input, shape index: {}]
  %s4 = inlined_call_operand.vmem [shape: bf16[128,128], index: 4, kind: input, shape index: {}]
  %s5 = inlined_call_operand.vmem [shape: f32[1,128], index: 5, kind: input, shape index: {}]
  %s6 = inlined_call_operand.hbm [shape: f32[8,128], index: 6, kind: output, shape index: {}]
  %s7 = sld [smem:[#allocation0]]
  $region34: #{lstm_glove_forward.1} parent=0
    _
  %s9 = ssub.s32 1, %s7
  %s10 = scalar_select 0, %s9, %s7
  $region1: #{lstm_glove_forward.1} parent=0
    #allocation3 [shape = 'u8[4096]{0}', space=vmem, size = 0x1000, scoped, tag = 'output window, operand 0, single buffered']
    #allocation4 [shape = 's32[1]{0}', space=sflag, size = 0x4, scoped, tag = 'scoped memory for lstm_glove_forward.1']
    %11 = vsyncpa [#allocation4], 0
    // Predicated region
    $region2: #{lstm_glove_forward.1} parent=1 // pred_check
      _
    $region3: #{lstm_glove_forward.1} parent=1 // pred_check_branch
      %13 = sbr.rel (0) target = $region5
    $region4: #{lstm_glove_forward.1} parent=1 // pred_region
      _
    $region5: #{lstm_glove_forward.1} parent=1 // pred_fallthru
      _
    // Predicated region
    $region6: #{lstm_glove_forward.1} parent=1 // pred_check
      _
    $region7: #{lstm_glove_forward.1} parent=1 // pred_check_branch
      %15 = sbr.rel (0) target = $region9
    $region8: #{lstm_glove_forward.1} parent=1 // pred_region
      _
    $region9: #{lstm_glove_forward.1} parent=1 // pred_fallthru
      _
    // Predicated region
    $region10: #{lstm_glove_forward.1} parent=1 // pred_check
      _
    $region11: #{lstm_glove_forward.1} parent=1 // pred_check_branch
      %17 = sbr.rel (0) target = $region13
    $region12: #{lstm_glove_forward.1} parent=1 // pred_region
      _
    $region13: #{lstm_glove_forward.1} parent=1 // pred_fallthru
      _
    // Predicated region
    $region14: #{lstm_glove_forward.1} parent=1 // pred_check
      _
    $region15: #{lstm_glove_forward.1} parent=1 // pred_check_branch
      %19 = sbr.rel (0) target = $region17
    $region16: #{lstm_glove_forward.1} parent=1 // pred_region
      _
    $region17: #{lstm_glove_forward.1} parent=1 // pred_fallthru
      _
    // Predicated region
    $region18: #{lstm_glove_forward.1} parent=1 // pred_check
      _
    $region19: #{lstm_glove_forward.1} parent=1 // pred_check_branch
      %21 = sbr.rel (0) target = $region21
    $region20: #{lstm_glove_forward.1} parent=1 // pred_region
      _
    $region21: #{lstm_glove_forward.1} parent=1 // pred_fallthru
      _
    // Predicated region
    $region22: #{lstm_glove_forward.1} parent=1 // pred_check
      _
    $region23: #{lstm_glove_forward.1} parent=1 // pred_check_branch
      %23 = sbr.rel (0) target = $region25
    $region24: #{lstm_glove_forward.1} parent=1 // pred_region
      _
    $region25: #{lstm_glove_forward.1} parent=1 // pred_fallthru
      _
    %v25 = vld [vmem:[%s0] sm:$0xf]
    %v26 = vld [vmem:[%s0 + $0x4] sm:$0xf]
    %v27 = vld [vmem:[%s0 + $0x8] sm:$0xf]
    %v28 = vld [vmem:[%s0 + $0xc] sm:$0xf]
    %v29 = vld [vmem:[%s0 + $0x10] sm:$0xf]
    %v30 = vld [vmem:[%s0 + $0x14] sm:$0xf]
    %v31 = vld [vmem:[%s0 + $0x18] sm:$0xf]
    %v32 = vld [vmem:[%s0 + $0x1c] sm:$0xf]
    %v33 = vld [vmem:[%s1] sm:$0xff]
    %v34 = vld [vmem:[%s1 + $0x8] sm:$0xff]
    %v35 = vld [vmem:[%s1 + $0x10] sm:$0xff]
    %v36 = vld [vmem:[%s1 + $0x18] sm:$0xff]
    %v37 = vld [vmem:[%s1 + $0x20] sm:$0xff]
    %v38 = vld [vmem:[%s1 + $0x28] sm:$0xff]
    %v39 = vld [vmem:[%s1 + $0x30] sm:$0xff]
    %v40 = vld [vmem:[%s1 + $0x38] sm:$0xff]
    %v41 = vld [vmem:[%s1 + $0x40] sm:$0xff]
    %v42 = vld [vmem:[%s1 + $0x48] sm:$0xff]
    %v43 = vld [vmem:[%s1 + $0x50] sm:$0xff]
    %v44 = vld [vmem:[%s1 + $0x58] sm:$0xff]
    %v45 = vld [vmem:[%s1 + $0x60] sm:$0xff]
    %v46 = vld [vmem:[%s1 + $0x68] sm:$0xff]
    %v47 = vld [vmem:[%s1 + $0x70] sm:$0xff]
    %v48 = vld [vmem:[%s1 + $0x78] sm:$0xff]
    %v49 = vld [vmem:[%s1 + $0x80] sm:$0xff]
    %v50 = vld [vmem:[%s1 + $0x88] sm:$0xff]
    %v51 = vld [vmem:[%s1 + $0x90] sm:$0xff]
    %v52 = vld [vmem:[%s1 + $0x98] sm:$0xff]
    %v53 = vld [vmem:[%s1 + $0xa0] sm:$0xff]
    %v54 = vld [vmem:[%s1 + $0xa8] sm:$0xff]
    %v55 = vld [vmem:[%s1 + $0xb0] sm:$0xff]
    %v56 = vld [vmem:[%s1 + $0xb8] sm:$0xff]
    %v57 = vld [vmem:[%s1 + $0xc0] sm:$0xff]
    %v58 = vld [vmem:[%s1 + $0xc8] sm:$0xff]
    %v59 = vld [vmem:[%s1 + $0xd0] sm:$0xff]
    %v60 = vld [vmem:[%s1 + $0xd8] sm:$0xff]
    %v61 = vld [vmem:[%s1 + $0xe0] sm:$0xff]
    %v62 = vld [vmem:[%s1 + $0xe8] sm:$0xff]
    %v63 = vld [vmem:[%s1 + $0xf0] sm:$0xff]
    %v64 = vld [vmem:[%s1 + $0xf8] sm:$0xff]
    %v65 = vld [vmem:[%s3] sm:$0xf]
    %v67 = vlaneseq
    %v68 = vshrl.u32 %v67, 7
    %v69 = vsub.s32 0, %v68
    %v70 = vrot.slane %v65, %v69
    %v71 = vlaneseq
    %v72 = vshrl.u32 %v71, 7
    %v73 = vsub.s32 1, %v72
    %v74 = vrot.slane %v65, %v73
    %v75 = vlaneseq
    %v76 = vshrl.u32 %v75, 7
    %v77 = vsub.s32 2, %v76
    %v78 = vrot.slane %v65, %v77
    %v79 = vlaneseq
    %v80 = vshrl.u32 %v79, 7
    %v81 = vsub.s32 3, %v80
    %v82 = vrot.slane %v65, %v81
    %v95 = vunpack.c.l.b16 %v25
    %v96 = vunpack.c.l.b16 %v26
    %v97 = vunpack.c.l.b16 %v27
    %v98 = vunpack.c.l.b16 %v28
    %v99 = vunpack.c.l.b16 %v29
    %v100 = vunpack.c.l.b16 %v30
    %v101 = vunpack.c.l.b16 %v31
    %v102 = vunpack.c.l.b16 %v32
    %v103 = vpack.c.b16 %v96, %v95
    %v104 = vpack.c.b16 %v98, %v97
    %v105 = vpack.c.b16 %v100, %v99
    %v106 = vpack.c.b16 %v102, %v101
    %v143 = vunpack.c.l.b16 %v33
    %v144 = vunpack.c.h.b16 %v33
    %v145 = vunpack.c.l.b16 %v34
    %v146 = vunpack.c.h.b16 %v34
    %v147 = vunpack.c.l.b16 %v35
    %v148 = vunpack.c.h.b16 %v35
    %v149 = vunpack.c.l.b16 %v36
    %v150 = vunpack.c.h.b16 %v36
    %v151 = vunpack.c.l.b16 %v37
    %v152 = vunpack.c.h.b16 %v37
    %v153 = vunpack.c.l.b16 %v38
    %v154 = vunpack.c.h.b16 %v38
    %v155 = vunpack.c.l.b16 %v39
    %v156 = vunpack.c.h.b16 %v39
    %v157 = vunpack.c.l.b16 %v40
    %v158 = vunpack.c.h.b16 %v40
    %v159 = vunpack.c.l.b16 %v41
    %v160 = vunpack.c.h.b16 %v41
    %v161 = vunpack.c.l.b16 %v42
    %v162 = vunpack.c.h.b16 %v42
    %v163 = vunpack.c.l.b16 %v43
    %v164 = vunpack.c.h.b16 %v43
    %v165 = vunpack.c.l.b16 %v44
    %v166 = vunpack.c.h.b16 %v44
    %v167 = vunpack.c.l.b16 %v45
    %v168 = vunpack.c.h.b16 %v45
    %v169 = vunpack.c.l.b16 %v46
    %v170 = vunpack.c.h.b16 %v46
    %v171 = vunpack.c.l.b16 %v47
    %v172 = vunpack.c.h.b16 %v47
    %v173 = vunpack.c.l.b16 %v48
    %v174 = vunpack.c.h.b16 %v48
    %v175 = vunpack.c.l.b16 %v49
    %v176 = vunpack.c.h.b16 %v49
    %v177 = vunpack.c.l.b16 %v50
    %v178 = vunpack.c.h.b16 %v50
    %v179 = vunpack.c.l.b16 %v51
    %v180 = vunpack.c.h.b16 %v51
    %v181 = vunpack.c.l.b16 %v52
    %v182 = vunpack.c.h.b16 %v52
    %v183 = vunpack.c.l.b16 %v53
    %v184 = vunpack.c.h.b16 %v53
    %v185 = vunpack.c.l.b16 %v54
    %v186 = vunpack.c.h.b16 %v54
    %v187 = vunpack.c.l.b16 %v55
    %v188 = vunpack.c.h.b16 %v55
    %v189 = vunpack.c.l.b16 %v56
    %v190 = vunpack.c.h.b16 %v56
    %v191 = vunpack.c.l.b16 %v57
    %v192 = vunpack.c.h.b16 %v57
    %v193 = vunpack.c.l.b16 %v58
    %v194 = vunpack.c.h.b16 %v58
    %v195 = vunpack.c.l.b16 %v59
    %v196 = vunpack.c.h.b16 %v59
    %v197 = vunpack.c.l.b16 %v60
    %v198 = vunpack.c.h.b16 %v60
    %v199 = vunpack.c.l.b16 %v61
    %v200 = vunpack.c.h.b16 %v61
    %v201 = vunpack.c.l.b16 %v62
    %v202 = vunpack.c.h.b16 %v62
    %v203 = vunpack.c.l.b16 %v63
    %v204 = vunpack.c.h.b16 %v63
    %v205 = vunpack.c.l.b16 %v64
    %v206 = vunpack.c.h.b16 %v64
    %v207 = vpack.c.b16 %v147, %v143
    %v208 = vpack.c.b16 %v148, %v144
    %v209 = vpack.c.b16 %v149, %v145
    %v210 = vpack.c.b16 %v150, %v146
    %v211 = vpack.c.b16 %v155, %v151
    %v212 = vpack.c.b16 %v156, %v152
    %v213 = vpack.c.b16 %v157, %v153
    %v214 = vpack.c.b16 %v158, %v154
    %v215 = vpack.c.b16 %v163, %v159
    %v216 = vpack.c.b16 %v164, %v160
    %v217 = vpack.c.b16 %v165, %v161
    %v218 = vpack.c.b16 %v166, %v162
    %v219 = vpack.c.b16 %v171, %v167
    %v220 = vpack.c.b16 %v172, %v168
    %v221 = vpack.c.b16 %v173, %v169
    %v222 = vpack.c.b16 %v174, %v170
    %v223 = vpack.c.b16 %v179, %v175
    %v224 = vpack.c.b16 %v180, %v176
    %v225 = vpack.c.b16 %v181, %v177
    %v226 = vpack.c.b16 %v182, %v178
    %v227 = vpack.c.b16 %v187, %v183
    %v228 = vpack.c.b16 %v188, %v184
    %v229 = vpack.c.b16 %v189, %v185
    %v230 = vpack.c.b16 %v190, %v186
    %v231 = vpack.c.b16 %v195, %v191
    %v232 = vpack.c.b16 %v196, %v192
    %v233 = vpack.c.b16 %v197, %v193
    %v234 = vpack.c.b16 %v198, %v194
    %v235 = vpack.c.b16 %v203, %v199
    %v236 = vpack.c.b16 %v204, %v200
    %v237 = vpack.c.b16 %v205, %v201
    %v238 = vpack.c.b16 %v206, %v202
    %271 = vmatprep.subr.bf16.mxu0 %v236
    %272 = vmatpush1.bf16.msra.mxu0 %v235
    %273 = vmatprep.subr.bf16.mxu0 %v232
    %274 = vmatpush1.bf16.msra.mxu0 %v231
    %275 = vmatprep.subr.bf16.mxu0 %v228
    %276 = vmatpush1.bf16.msra.mxu0 %v227
    %277 = vmatprep.subr.bf16.mxu0 %v224
    %278 = vmatpush1.bf16.msra.mxu0 %v223
    %279 = vmatprep.subr.bf16.mxu0 %v220
    %280 = vmatpush1.bf16.msra.mxu0 %v219
    %281 = vmatprep.subr.bf16.mxu0 %v216
    %282 = vmatpush1.bf16.msra.mxu0 %v215
    %283 = vmatprep.subr.bf16.mxu0 %v212
    %284 = vmatpush1.bf16.msra.mxu0 %v211
    %285 = vmatprep.subr.bf16.mxu0 %v208
    %286 = vmatpush1.bf16.msra.mxu0 %v207
    %287 = vmatprep.subr.bf16.mxu0 0
    %288 = vmatpush2.bf16.msra.mxu0 0
    %289 = vmatprep.subr.bf16.mxu0 0
    %290 = vmatpush2.bf16.msra.mxu0 0
    %291 = vmatprep.subr.bf16.mxu0 0
    %292 = vmatpush2.bf16.msra.mxu0 0
    %293 = vmatprep.subr.bf16.mxu0 0
    %294 = vmatpush2.bf16.msra.mxu0 0
    %295 = vmatprep.subr.bf16.mxu0 0
    %296 = vmatpush2.bf16.msra.mxu0 0
    %297 = vmatprep.subr.bf16.mxu0 0
    %298 = vmatpush2.bf16.msra.mxu0 0
    %299 = vmatprep.subr.bf16.mxu0 0
    %300 = vmatpush2.bf16.msra.mxu0 0
    %301 = vmatprep.subr.bf16.mxu0 0
    %302 = vmatpush2.bf16.msra.mxu0 0
    %303 = vmatprep.mubr.bf16.mxu0 0
    %304 = vmatmul.mubr.bf16.gmra.mxu0 %v103
    %v305 = vpop.f32.mrf.mxu0
    %v306 = vadd.f32 %v70, %v305
    %v307 = vpop.f32.mrf.mxu0
    %v308 = vadd.f32 %v74, %v307
    %v309 = vpop.f32.mrf.mxu0
    %v310 = vadd.f32 %v70, %v309
    %v311 = vpop.f32.mrf.mxu0
    %v312 = vadd.f32 %v74, %v311
    %313 = vmatprep.mubr.bf16.mxu0 0
    %314 = vmatmul.mubr.bf16.gmra.mxu0 %v104
    %v315 = vpop.f32.mrf.mxu0
    %v316 = vadd.f32 %v70, %v315
    %v317 = vpop.f32.mrf.mxu0
    %v318 = vadd.f32 %v74, %v317
    %v319 = vpop.f32.mrf.mxu0
    %v320 = vadd.f32 %v70, %v319
    %v321 = vpop.f32.mrf.mxu0
    %v322 = vadd.f32 %v74, %v321
    %323 = vmatprep.mubr.bf16.mxu0 0
    %324 = vmatmul.mubr.bf16.gmra.mxu0 %v105
    %v325 = vpop.f32.mrf.mxu0
    %v326 = vadd.f32 %v70, %v325
    %v327 = vpop.f32.mrf.mxu0
    %v328 = vadd.f32 %v74, %v327
    %v329 = vpop.f32.mrf.mxu0
    %v330 = vadd.f32 %v70, %v329
    %v331 = vpop.f32.mrf.mxu0
    %v332 = vadd.f32 %v74, %v331
    %333 = vmatprep.mubr.bf16.mxu0 0
    %334 = vmatmul.mubr.bf16.gmra.mxu0 %v106
    %v335 = vpop.f32.mrf.mxu0
    %v336 = vadd.f32 %v70, %v335
    %v337 = vpop.f32.mrf.mxu0
    %v338 = vadd.f32 %v74, %v337
    %v339 = vpop.f32.mrf.mxu0
    %v340 = vadd.f32 %v70, %v339
    %v341 = vpop.f32.mrf.mxu0
    %v342 = vadd.f32 %v74, %v341
    %343 = vdwg.mxu0
    %344 = vmatprep.subr.bf16.mxu0 %v238
    %345 = vmatpush1.bf16.msra.mxu0 %v237
    %346 = vmatprep.subr.bf16.mxu0 %v234
    %347 = vmatpush1.bf16.msra.mxu0 %v233
    %348 = vmatprep.subr.bf16.mxu0 %v230
    %349 = vmatpush1.bf16.msra.mxu0 %v229
    %350 = vmatprep.subr.bf16.mxu0 %v226
    %351 = vmatpush1.bf16.msra.mxu0 %v225
    %352 = vmatprep.subr.bf16.mxu0 %v222
    %353 = vmatpush1.bf16.msra.mxu0 %v221
    %354 = vmatprep.subr.bf16.mxu0 %v218
    %355 = vmatpush1.bf16.msra.mxu0 %v217
    %356 = vmatprep.subr.bf16.mxu0 %v214
    %357 = vmatpush1.bf16.msra.mxu0 %v213
    %358 = vmatprep.subr.bf16.mxu0 %v210
    %359 = vmatpush1.bf16.msra.mxu0 %v209
    %360 = vmatprep.subr.bf16.mxu0 0
    %361 = vmatpush2.bf16.msra.mxu0 0
    %362 = vmatprep.subr.bf16.mxu0 0
    %363 = vmatpush2.bf16.msra.mxu0 0
    %364 = vmatprep.subr.bf16.mxu0 0
    %365 = vmatpush2.bf16.msra.mxu0 0
    %366 = vmatprep.subr.bf16.mxu0 0
    %367 = vmatpush2.bf16.msra.mxu0 0
    %368 = vmatprep.subr.bf16.mxu0 0
    %369 = vmatpush2.bf16.msra.mxu0 0
    %370 = vmatprep.subr.bf16.mxu0 0
    %371 = vmatpush2.bf16.msra.mxu0 0
    %372 = vmatprep.subr.bf16.mxu0 0
    %373 = vmatpush2.bf16.msra.mxu0 0
    %374 = vmatprep.subr.bf16.mxu0 0
    %375 = vmatpush2.bf16.msra.mxu0 0
    %376 = vmatprep.mubr.bf16.mxu0 0
    %377 = vmatmul.mubr.bf16.gmra.mxu0 %v103
    %v378 = vpop.f32.mrf.mxu0
    %v379 = vadd.f32 %v78, %v378
    %v380 = vpop.f32.mrf.mxu0
    %v381 = vadd.f32 %v82, %v380
    %v382 = vpop.f32.mrf.mxu0
    %v383 = vadd.f32 %v78, %v382
    %v384 = vpop.f32.mrf.mxu0
    %v385 = vadd.f32 %v82, %v384
    %386 = vmatprep.mubr.bf16.mxu0 0
    %387 = vmatmul.mubr.bf16.gmra.mxu0 %v104
    %v388 = vpop.f32.mrf.mxu0
    %v389 = vadd.f32 %v78, %v388
    %v390 = vpop.f32.mrf.mxu0
    %v391 = vadd.f32 %v82, %v390
    %v392 = vpop.f32.mrf.mxu0
    %v393 = vadd.f32 %v78, %v392
    %v394 = vpop.f32.mrf.mxu0
    %v395 = vadd.f32 %v82, %v394
    %396 = vmatprep.mubr.bf16.mxu0 0
    %397 = vmatmul.mubr.bf16.gmra.mxu0 %v105
    %v398 = vpop.f32.mrf.mxu0
    %v399 = vadd.f32 %v78, %v398
    %v400 = vpop.f32.mrf.mxu0
    %v401 = vadd.f32 %v82, %v400
    %v402 = vpop.f32.mrf.mxu0
    %v403 = vadd.f32 %v78, %v402
    %v404 = vpop.f32.mrf.mxu0
    %v405 = vadd.f32 %v82, %v404
    %406 = vmatprep.mubr.bf16.mxu0 0
    %407 = vmatmul.mubr.bf16.gmra.mxu0 %v106
    %v408 = vpop.f32.mrf.mxu0
    %v409 = vadd.f32 %v78, %v408
    %v410 = vpop.f32.mrf.mxu0
    %v411 = vadd.f32 %v82, %v410
    %v412 = vpop.f32.mrf.mxu0
    %v413 = vadd.f32 %v78, %v412
    %v414 = vpop.f32.mrf.mxu0
    %v415 = vadd.f32 %v82, %v414
    %416 = vdwg.mxu0
    %417 = vst [vmem:[#allocation2] sm:$0xff] %v306
    %418 = vst [vmem:[#allocation2 + $0x8] sm:$0xff] %v308
    %419 = vst [vmem:[#allocation2 + $0x10] sm:$0xff] %v379
    %420 = vst [vmem:[#allocation2 + $0x18] sm:$0xff] %v381
    %421 = vst [vmem:[#allocation2 + $0x20] sm:$0xff] %v310
    %422 = vst [vmem:[#allocation2 + $0x28] sm:$0xff] %v312
    %423 = vst [vmem:[#allocation2 + $0x30] sm:$0xff] %v383
    %424 = vst [vmem:[#allocation2 + $0x38] sm:$0xff] %v385
    %425 = vst [vmem:[#allocation2 + $0x40] sm:$0xff] %v316
    %426 = vst [vmem:[#allocation2 + $0x48] sm:$0xff] %v318
    %427 = vst [vmem:[#allocation2 + $0x50] sm:$0xff] %v389
    %428 = vst [vmem:[#allocation2 + $0x58] sm:$0xff] %v391
    %429 = vst [vmem:[#allocation2 + $0x60] sm:$0xff] %v320
    %430 = vst [vmem:[#allocation2 + $0x68] sm:$0xff] %v322
    %431 = vst [vmem:[#allocation2 + $0x70] sm:$0xff] %v393
    %432 = vst [vmem:[#allocation2 + $0x78] sm:$0xff] %v395
    %433 = vst [vmem:[#allocation2 + $0x80] sm:$0xff] %v326
    %434 = vst [vmem:[#allocation2 + $0x88] sm:$0xff] %v328
    %435 = vst [vmem:[#allocation2 + $0x90] sm:$0xff] %v399
    %436 = vst [vmem:[#allocation2 + $0x98] sm:$0xff] %v401
    %437 = vst [vmem:[#allocation2 + $0xa0] sm:$0xff] %v330
    %438 = vst [vmem:[#allocation2 + $0xa8] sm:$0xff] %v332
    %439 = vst [vmem:[#allocation2 + $0xb0] sm:$0xff] %v403
    %440 = vst [vmem:[#allocation2 + $0xb8] sm:$0xff] %v405
    %441 = vst [vmem:[#allocation2 + $0xc0] sm:$0xff] %v336
    %442 = vst [vmem:[#allocation2 + $0xc8] sm:$0xff] %v338
    %443 = vst [vmem:[#allocation2 + $0xd0] sm:$0xff] %v409
    %444 = vst [vmem:[#allocation2 + $0xd8] sm:$0xff] %v411
    %445 = vst [vmem:[#allocation2 + $0xe0] sm:$0xff] %v340
    %446 = vst [vmem:[#allocation2 + $0xe8] sm:$0xff] %v342
    %447 = vst [vmem:[#allocation2 + $0xf0] sm:$0xff] %v413
    %448 = vst [vmem:[#allocation2 + $0xf8] sm:$0xff] %v415
    %v449 = vld [vmem:[%s2] sm:$0xff]
    %v450 = vld [vmem:[%s2 + $0x8] sm:$0xff]
    %v451 = vld [vmem:[%s2 + $0x10] sm:$0xff]
    %v452 = vld [vmem:[%s2 + $0x18] sm:$0xff]
    %v453 = vld [vmem:[%s2 + $0x20] sm:$0xff]
    %v454 = vld [vmem:[%s2 + $0x28] sm:$0xff]
    %v455 = vld [vmem:[%s2 + $0x30] sm:$0xff]
    %v456 = vld [vmem:[%s2 + $0x38] sm:$0xff]
    %v457 = vld [vmem:[%s2 + $0x40] sm:$0xff]
    %v458 = vld [vmem:[%s2 + $0x48] sm:$0xff]
    %v459 = vld [vmem:[%s2 + $0x50] sm:$0xff]
    %v460 = vld [vmem:[%s2 + $0x58] sm:$0xff]
    %v461 = vld [vmem:[%s2 + $0x60] sm:$0xff]
    %v462 = vld [vmem:[%s2 + $0x68] sm:$0xff]
    %v463 = vld [vmem:[%s2 + $0x70] sm:$0xff]
    %v464 = vld [vmem:[%s2 + $0x78] sm:$0xff]
    %v465 = vld [vmem:[%s2 + $0x80] sm:$0xff]
    %v466 = vld [vmem:[%s2 + $0x88] sm:$0xff]
    %v467 = vld [vmem:[%s2 + $0x90] sm:$0xff]
    %v468 = vld [vmem:[%s2 + $0x98] sm:$0xff]
    %v469 = vld [vmem:[%s2 + $0xa0] sm:$0xff]
    %v470 = vld [vmem:[%s2 + $0xa8] sm:$0xff]
    %v471 = vld [vmem:[%s2 + $0xb0] sm:$0xff]
    %v472 = vld [vmem:[%s2 + $0xb8] sm:$0xff]
    %v473 = vld [vmem:[%s2 + $0xc0] sm:$0xff]
    %v474 = vld [vmem:[%s2 + $0xc8] sm:$0xff]
    %v475 = vld [vmem:[%s2 + $0xd0] sm:$0xff]
    %v476 = vld [vmem:[%s2 + $0xd8] sm:$0xff]
    %v477 = vld [vmem:[%s2 + $0xe0] sm:$0xff]
    %v478 = vld [vmem:[%s2 + $0xe8] sm:$0xff]
    %v479 = vld [vmem:[%s2 + $0xf0] sm:$0xff]
    %v480 = vld [vmem:[%s2 + $0xf8] sm:$0xff]
    %s481 = smul.u32 0, 4
    %s482 = smul.addr %s481, 8
    %s483 = scalar_lea.vmem [#allocation2], %s482
    %v484 = vld [vmem:[%s483] sm:$0xff]
    %v485 = vld [vmem:[%s483 + $0x8] sm:$0xff]
    %v486 = vld [vmem:[%s483 + $0x10] sm:$0xff]
    %v487 = vld [vmem:[%s483 + $0x18] sm:$0xff]
    %v520 = vunpack.c.l.b16 %v449
    %v521 = vunpack.c.h.b16 %v449
    %v522 = vunpack.c.l.b16 %v450
    %v523 = vunpack.c.h.b16 %v450
    %v524 = vunpack.c.l.b16 %v451
    %v525 = vunpack.c.h.b16 %v451
    %v526 = vunpack.c.l.b16 %v452
    %v527 = vunpack.c.h.b16 %v452
    %v528 = vunpack.c.l.b16 %v453
    %v529 = vunpack.c.h.b16 %v453
    %v530 = vunpack.c.l.b16 %v454
    %v531 = vunpack.c.h.b16 %v454
    %v532 = vunpack.c.l.b16 %v455
    %v533 = vunpack.c.h.b16 %v455
    %v534 = vunpack.c.l.b16 %v456
    %v535 = vunpack.c.h.b16 %v456
    %v536 = vunpack.c.l.b16 %v457
    %v537 = vunpack.c.h.b16 %v457
    %v538 = vunpack.c.l.b16 %v458
    %v539 = vunpack.c.h.b16 %v458
    %v540 = vunpack.c.l.b16 %v459
    %v541 = vunpack.c.h.b16 %v459
    %v542 = vunpack.c.l.b16 %v460
    %v543 = vunpack.c.h.b16 %v460
    %v544 = vunpack.c.l.b16 %v461
    %v545 = vunpack.c.h.b16 %v461
    %v546 = vunpack.c.l.b16 %v462
    %v547 = vunpack.c.h.b16 %v462
    %v548 = vunpack.c.l.b16 %v463
    %v549 = vunpack.c.h.b16 %v463
    %v550 = vunpack.c.l.b16 %v464
    %v551 = vunpack.c.h.b16 %v464
    %v552 = vunpack.c.l.b16 %v465
    %v553 = vunpack.c.h.b16 %v465
    %v554 = vunpack.c.l.b16 %v466
    %v555 = vunpack.c.h.b16 %v466
    %v556 = vunpack.c.l.b16 %v467
    %v557 = vunpack.c.h.b16 %v467
    %v558 = vunpack.c.l.b16 %v468
    %v559 = vunpack.c.h.b16 %v468
    %v560 = vunpack.c.l.b16 %v469
    %v561 = vunpack.c.h.b16 %v469
    %v562 = vunpack.c.l.b16 %v470
    %v563 = vunpack.c.h.b16 %v470
    %v564 = vunpack.c.l.b16 %v471
    %v565 = vunpack.c.h.b16 %v471
    %v566 = vunpack.c.l.b16 %v472
    %v567 = vunpack.c.h.b16 %v472
    %v568 = vunpack.c.l.b16 %v473
    %v569 = vunpack.c.h.b16 %v473
    %v570 = vunpack.c.l.b16 %v474
    %v571 = vunpack.c.h.b16 %v474
    %v572 = vunpack.c.l.b16 %v475
    %v573 = vunpack.c.h.b16 %v475
    %v574 = vunpack.c.l.b16 %v476
    %v575 = vunpack.c.h.b16 %v476
    %v576 = vunpack.c.l.b16 %v477
    %v577 = vunpack.c.h.b16 %v477
    %v578 = vunpack.c.l.b16 %v478
    %v579 = vunpack.c.h.b16 %v478
    %v580 = vunpack.c.l.b16 %v479
    %v581 = vunpack.c.h.b16 %v479
    %v582 = vunpack.c.l.b16 %v480
    %v583 = vunpack.c.h.b16 %v480
    %v584 = vpack.c.b16 %v524, %v520
    %v585 = vpack.c.b16 %v525, %v521
    %v586 = vpack.c.b16 %v526, %v522
    %v587 = vpack.c.b16 %v527, %v523
    %v588 = vpack.c.b16 %v532, %v528
    %v589 = vpack.c.b16 %v533, %v529
    %v590 = vpack.c.b16 %v534, %v530
    %v591 = vpack.c.b16 %v535, %v531
    %v592 = vpack.c.b16 %v540, %v536
    %v593 = vpack.c.b16 %v541, %v537
    %v594 = vpack.c.b16 %v542, %v538
    %v595 = vpack.c.b16 %v543, %v539
    %v596 = vpack.c.b16 %v548, %v544
    %v597 = vpack.c.b16 %v549, %v545
    %v598 = vpack.c.b16 %v550, %v546
    %v599 = vpack.c.b16 %v551, %v547
    %v600 = vpack.c.b16 %v556, %v552
    %v601 = vpack.c.b16 %v557, %v553
    %v602 = vpack.c.b16 %v558, %v554
    %v603 = vpack.c.b16 %v559, %v555
    %v604 = vpack.c.b16 %v564, %v560
    %v605 = vpack.c.b16 %v565, %v561
    %v606 = vpack.c.b16 %v566, %v562
    %v607 = vpack.c.b16 %v567, %v563
    %v608 = vpack.c.b16 %v572, %v568
    %v609 = vpack.c.b16 %v573, %v569
    %v610 = vpack.c.b16 %v574, %v570
    %v611 = vpack.c.b16 %v575, %v571
    %v612 = vpack.c.b16 %v580, %v576
    %v613 = vpack.c.b16 %v581, %v577
    %v614 = vpack.c.b16 %v582, %v578
    %v615 = vpack.c.b16 %v583, %v579
    %648 = vmatprep.subr.bf16.mxu0 %v613
    %649 = vmatpush1.bf16.msra.mxu0 %v612
    %650 = vmatprep.subr.bf16.mxu0 %v609
    %651 = vmatpush1.bf16.msra.mxu0 %v608
    %652 = vmatprep.subr.bf16.mxu0 %v605
    %653 = vmatpush1.bf16.msra.mxu0 %v604
    %654 = vmatprep.subr.bf16.mxu0 %v601
    %655 = vmatpush1.bf16.msra.mxu0 %v600
    %656 = vmatprep.subr.bf16.mxu0 %v597
    %657 = vmatpush1.bf16.msra.mxu0 %v596
    %658 = vmatprep.subr.bf16.mxu0 %v593
    %659 = vmatpush1.bf16.msra.mxu0 %v592
    %660 = vmatprep.subr.bf16.mxu0 %v589
    %661 = vmatpush1.bf16.msra.mxu0 %v588
    %662 = vmatprep.subr.bf16.mxu0 %v585
    %663 = vmatpush1.bf16.msra.mxu0 %v584
    %664 = vmatprep.subr.bf16.mxu0 0
    %665 = vmatpush2.bf16.msra.mxu0 0
    %666 = vmatprep.subr.bf16.mxu0 0
    %667 = vmatpush2.bf16.msra.mxu0 0
    %668 = vmatprep.subr.bf16.mxu0 0
    %669 = vmatpush2.bf16.msra.mxu0 0
    %670 = vmatprep.subr.bf16.mxu0 0
    %671 = vmatpush2.bf16.msra.mxu0 0
    %672 = vmatprep.subr.bf16.mxu0 0
    %673 = vmatpush2.bf16.msra.mxu0 0
    %674 = vmatprep.subr.bf16.mxu0 0
    %675 = vmatpush2.bf16.msra.mxu0 0
    %676 = vmatprep.subr.bf16.mxu0 0
    %677 = vmatpush2.bf16.msra.mxu0 0
    %678 = vmatprep.subr.bf16.mxu0 0
    %679 = vmatpush2.bf16.msra.mxu0 0
    %680 = vmatprep.mubr.bf16.mxu0 0
    %681 = vmatmul.mubr.bf16.gmra.mxu0 0
    %v682 = vpop.f32.mrf.mxu0
    %v683 = vadd.f32 0.0, %v682
    %v684 = vpop.f32.mrf.mxu0
    %v685 = vadd.f32 0.0, %v684
    %v686 = vpop.f32.mrf.mxu0
    %v687 = vpop.f32.mrf.mxu0
    %688 = vdwg.mxu0
    %689 = vmatprep.subr.bf16.mxu0 %v615
    %690 = vmatpush1.bf16.msra.mxu0 %v614
    %691 = vmatprep.subr.bf16.mxu0 %v611
    %692 = vmatpush1.bf16.msra.mxu0 %v610
    %693 = vmatprep.subr.bf16.mxu0 %v607
    %694 = vmatpush1.bf16.msra.mxu0 %v606
    %695 = vmatprep.subr.bf16.mxu0 %v603
    %696 = vmatpush1.bf16.msra.mxu0 %v602
    %697 = vmatprep.subr.bf16.mxu0 %v599
    %698 = vmatpush1.bf16.msra.mxu0 %v598
    %699 = vmatprep.subr.bf16.mxu0 %v595
    %700 = vmatpush1.bf16.msra.mxu0 %v594
    %701 = vmatprep.subr.bf16.mxu0 %v591
    %702 = vmatpush1.bf16.msra.mxu0 %v590
    %703 = vmatprep.subr.bf16.mxu0 %v587
    %704 = vmatpush1.bf16.msra.mxu0 %v586
    %705 = vmatprep.subr.bf16.mxu0 0
    %706 = vmatpush2.bf16.msra.mxu0 0
    %707 = vmatprep.subr.bf16.mxu0 0
    %708 = vmatpush2.bf16.msra.mxu0 0
    %709 = vmatprep.subr.bf16.mxu0 0
    %710 = vmatpush2.bf16.msra.mxu0 0
    %711 = vmatprep.subr.bf16.mxu0 0
    %712 = vmatpush2.bf16.msra.mxu0 0
    %713 = vmatprep.subr.bf16.mxu0 0
    %714 = vmatpush2.bf16.msra.mxu0 0
    %715 = vmatprep.subr.bf16.mxu0 0
    %716 = vmatpush2.bf16.msra.mxu0 0
    %717 = vmatprep.subr.bf16.mxu0 0
    %718 = vmatpush2.bf16.msra.mxu0 0
    %719 = vmatprep.subr.bf16.mxu0 0
    %720 = vmatpush2.bf16.msra.mxu0 0
    %721 = vmatprep.mubr.bf16.mxu0 0
    %722 = vmatmul.mubr.bf16.gmra.mxu0 0
    %v723 = vpop.f32.mrf.mxu0
    %v724 = vadd.f32 0.0, %v723
    %v725 = vpop.f32.mrf.mxu0
    %v726 = vadd.f32 0.0, %v725
    %v727 = vpop.f32.mrf.mxu0
    %v728 = vpop.f32.mrf.mxu0
    %729 = vdwg.mxu0
    %v730 = vadd.f32 %v484, %v683
    %v731 = vadd.f32 %v485, %v685
    %v732 = vadd.f32 %v486, %v724
    %v733 = vadd.f32 %v487, %v726
    %v734 = vxor.u32 %v730, 2147483648
    %v735 = vmul.f32 %v734, 1.442695
    %v736 = vpow.pop %v735
    %v737 = vadd.f32 %v736, 1.0
    %v738 = vrcp.pop %v737
    %v739 = vmul.f32 1.0, %v738
    %v740 = vxor.u32 %v731, 2147483648
    %v741 = vmul.f32 %v740, 1.442695
    %v742 = vpow.pop %v741
    %v743 = vadd.f32 %v742, 1.0
    %v744 = vrcp.pop %v743
    %v745 = vmul.f32 1.0, %v744
    %v746 = vtanh.pop %v732
    %v747 = vxor.u32 %v733, 2147483648
    %v748 = vmul.f32 %v747, 1.442695
    %v749 = vpow.pop %v748
    %v750 = vadd.f32 %v749, 1.0
    %v751 = vrcp.pop %v750
    %v752 = vmul.f32 1.0, %v751
    %v753 = vmul.f32 %v745, 0.0
    %v754 = vmul.f32 %v739, %v746
    %v755 = vadd.f32 %v753, %v754
    %v756 = vtanh.pop %v755
    %v757 = vmul.f32 %v752, %v756
    %s758 = smul.u32 1, 4
    %s759 = smul.addr %s758, 8
    %s760 = scalar_lea.vmem [#allocation2], %s759
    %v761 = vld [vmem:[%s760] sm:$0xff]
    %v762 = vld [vmem:[%s760 + $0x8] sm:$0xff]
    %v763 = vld [vmem:[%s760 + $0x10] sm:$0xff]
    %v764 = vld [vmem:[%s760 + $0x18] sm:$0xff]
    %v765 = vpack.c.bf16 %v757, %v757
    %766 = vmatprep.subr.bf16.mxu0 %v613
    %767 = vmatpush1.bf16.msra.mxu0 %v612
    %768 = vmatprep.subr.bf16.mxu0 %v609
    %769 = vmatpush1.bf16.msra.mxu0 %v608
    %770 = vmatprep.subr.bf16.mxu0 %v605
    %771 = vmatpush1.bf16.msra.mxu0 %v604
    %772 = vmatprep.subr.bf16.mxu0 %v601
    %773 = vmatpush1.bf16.msra.mxu0 %v600
    %774 = vmatprep.subr.bf16.mxu0 %v597
    %775 = vmatpush1.bf16.msra.mxu0 %v596
    %776 = vmatprep.subr.bf16.mxu0 %v593
    %777 = vmatpush1.bf16.msra.mxu0 %v592
    %778 = vmatprep.subr.bf16.mxu0 %v589
    %779 = vmatpush1.bf16.msra.mxu0 %v588
    %780 = vmatprep.subr.bf16.mxu0 %v585
    %781 = vmatpush1.bf16.msra.mxu0 %v584
    %782 = vmatprep.subr.bf16.mxu0 0
    %783 = vmatpush2.bf16.msra.mxu0 0
    %784 = vmatprep.subr.bf16.mxu0 0
    %785 = vmatpush2.bf16.msra.mxu0 0
    %786 = vmatprep.subr.bf16.mxu0 0
    %787 = vmatpush2.bf16.msra.mxu0 0
    %788 = vmatprep.subr.bf16.mxu0 0
    %789 = vmatpush2.bf16.msra.mxu0 0
    %790 = vmatprep.subr.bf16.mxu0 0
    %791 = vmatpush2.bf16.msra.mxu0 0
    %792 = vmatprep.subr.bf16.mxu0 0
    %793 = vmatpush2.bf16.msra.mxu0 0
    %794 = vmatprep.subr.bf16.mxu0 0
    %795 = vmatpush2.bf16.msra.mxu0 0
    %796 = vmatprep.subr.bf16.mxu0 0
    %797 = vmatpush2.bf16.msra.mxu0 0
    %798 = vmatprep.mubr.bf16.mxu0 0
    %799 = vmatmul.mubr.bf16.gmra.mxu0 %v765
    %v800 = vpop.f32.mrf.mxu0
    %v801 = vadd.f32 0.0, %v800
    %v802 = vpop.f32.mrf.mxu0
    %v803 = vadd.f32 0.0, %v802
    %v804 = vpop.f32.mrf.mxu0
    %v805 = vpop.f32.mrf.mxu0
    %806 = vdwg.mxu0
    %807 = vmatprep.subr.bf16.mxu0 %v615
    %808 = vmatpush1.bf16.msra.mxu0 %v614
    %809 = vmatprep.subr.bf16.mxu0 %v611
    %810 = vmatpush1.bf16.msra.mxu0 %v610
    %811 = vmatprep.subr.bf16.mxu0 %v607
    %812 = vmatpush1.bf16.msra.mxu0 %v606
    %813 = vmatprep.subr.bf16.mxu0 %v603
    %814 = vmatpush1.bf16.msra.mxu0 %v602
    %815 = vmatprep.subr.bf16.mxu0 %v599
    %816 = vmatpush1.bf16.msra.mxu0 %v598
    %817 = vmatprep.subr.bf16.mxu0 %v595
    %818 = vmatpush1.bf16.msra.mxu0 %v594
    %819 = vmatprep.subr.bf16.mxu0 %v591
    %820 = vmatpush1.bf16.msra.mxu0 %v590
    %821 = vmatprep.subr.bf16.mxu0 %v587
    %822 = vmatpush1.bf16.msra.mxu0 %v586
    %823 = vmatprep.subr.bf16.mxu0 0
    %824 = vmatpush2.bf16.msra.mxu0 0
    %825 = vmatprep.subr.bf16.mxu0 0
    %826 = vmatpush2.bf16.msra.mxu0 0
    %827 = vmatprep.subr.bf16.mxu0 0
    %828 = vmatpush2.bf16.msra.mxu0 0
    %829 = vmatprep.subr.bf16.mxu0 0
    %830 = vmatpush2.bf16.msra.mxu0 0
    %831 = vmatprep.subr.bf16.mxu0 0
    %832 = vmatpush2.bf16.msra.mxu0 0
    %833 = vmatprep.subr.bf16.mxu0 0
    %834 = vmatpush2.bf16.msra.mxu0 0
    %835 = vmatprep.subr.bf16.mxu0 0
    %836 = vmatpush2.bf16.msra.mxu0 0
    %837 = vmatprep.subr.bf16.mxu0 0
    %838 = vmatpush2.bf16.msra.mxu0 0
    %839 = vmatprep.mubr.bf16.mxu0 0
    %840 = vmatmul.mubr.bf16.gmra.mxu0 %v765
    %v841 = vpop.f32.mrf.mxu0
    %v842 = vadd.f32 0.0, %v841
    %v843 = vpop.f32.mrf.mxu0
    %v844 = vadd.f32 0.0, %v843
    %v845 = vpop.f32.mrf.mxu0
    %v846 = vpop.f32.mrf.mxu0
    %847 = vdwg.mxu0
    %v848 = vadd.f32 %v761, %v801
    %v849 = vadd.f32 %v762, %v803
    %v850 = vadd.f32 %v763, %v842
    %v851 = vadd.f32 %v764, %v844
    %v852 = vxor.u32 %v848, 2147483648
    %v853 = vmul.f32 %v852, 1.442695
    %v854 = vpow.pop %v853
    %v855 = vadd.f32 %v854, 1.0
    %v856 = vrcp.pop %v855
    %v857 = vmul.f32 1.0, %v856
    %v858 = vxor.u32 %v849, 2147483648
    %v859 = vmul.f32 %v858, 1.442695
    %v860 = vpow.pop %v859
    %v861 = vadd.f32 %v860, 1.0
    %v862 = vrcp.pop %v861
    %v863 = vmul.f32 1.0, %v862
    %v864 = vtanh.pop %v850
    %v865 = vxor.u32 %v851, 2147483648
    %v866 = vmul.f32 %v865, 1.442695
    %v867 = vpow.pop %v866
    %v868 = vadd.f32 %v867, 1.0
    %v869 = vrcp.pop %v868
    %v870 = vmul.f32 1.0, %v869
    %v871 = vmul.f32 %v863, %v755
    %v872 = vmul.f32 %v857, %v864
    %v873 = vadd.f32 %v871, %v872
    %v874 = vtanh.pop %v873
    %v875 = vmul.f32 %v870, %v874
    %s876 = smul.u32 2, 4
    %s877 = smul.addr %s876, 8
    %s878 = scalar_lea.vmem [#allocation2], %s877
    %v879 = vld [vmem:[%s878] sm:$0xff]
    %v880 = vld [vmem:[%s878 + $0x8] sm:$0xff]
    %v881 = vld [vmem:[%s878 + $0x10] sm:$0xff]
    %v882 = vld [vmem:[%s878 + $0x18] sm:$0xff]
    %v883 = vpack.c.bf16 %v875, %v875
    %884 = vmatprep.subr.bf16.mxu0 %v613
    %885 = vmatpush1.bf16.msra.mxu0 %v612
    %886 = vmatprep.subr.bf16.mxu0 %v609
    %887 = vmatpush1.bf16.msra.mxu0 %v608
    %888 = vmatprep.subr.bf16.mxu0 %v605
    %889 = vmatpush1.bf16.msra.mxu0 %v604
    %890 = vmatprep.subr.bf16.mxu0 %v601
    %891 = vmatpush1.bf16.msra.mxu0 %v600
    %892 = vmatprep.subr.bf16.mxu0 %v597
    %893 = vmatpush1.bf16.msra.mxu0 %v596
    %894 = vmatprep.subr.bf16.mxu0 %v593
    %895 = vmatpush1.bf16.msra.mxu0 %v592
    %896 = vmatprep.subr.bf16.mxu0 %v589
    %897 = vmatpush1.bf16.msra.mxu0 %v588
    %898 = vmatprep.subr.bf16.mxu0 %v585
    %899 = vmatpush1.bf16.msra.mxu0 %v584
    %900 = vmatprep.subr.bf16.mxu0 0
    %901 = vmatpush2.bf16.msra.mxu0 0
    %902 = vmatprep.subr.bf16.mxu0 0
    %903 = vmatpush2.bf16.msra.mxu0 0
    %904 = vmatprep.subr.bf16.mxu0 0
    %905 = vmatpush2.bf16.msra.mxu0 0
    %906 = vmatprep.subr.bf16.mxu0 0
    %907 = vmatpush2.bf16.msra.mxu0 0
    %908 = vmatprep.subr.bf16.mxu0 0
    %909 = vmatpush2.bf16.msra.mxu0 0
    %910 = vmatprep.subr.bf16.mxu0 0
    %911 = vmatpush2.bf16.msra.mxu0 0
    %912 = vmatprep.subr.bf16.mxu0 0
    %913 = vmatpush2.bf16.msra.mxu0 0
    %914 = vmatprep.subr.bf16.mxu0 0
    %915 = vmatpush2.bf16.msra.mxu0 0
    %916 = vmatprep.mubr.bf16.mxu0 0
    %917 = vmatmul.mubr.bf16.gmra.mxu0 %v883
    %v918 = vpop.f32.mrf.mxu0
    %v919 = vadd.f32 0.0, %v918
    %v920 = vpop.f32.mrf.mxu0
    %v921 = vadd.f32 0.0, %v920
    %v922 = vpop.f32.mrf.mxu0
    %v923 = vpop.f32.mrf.mxu0
    %924 = vdwg.mxu0
    %925 = vmatprep.subr.bf16.mxu0 %v615
    %926 = vmatpush1.bf16.msra.mxu0 %v614
    %927 = vmatprep.subr.bf16.mxu0 %v611
    %928 = vmatpush1.bf16.msra.mxu0 %v610
    %929 = vmatprep.subr.bf16.mxu0 %v607
    %930 = vmatpush1.bf16.msra.mxu0 %v606
    %931 = vmatprep.subr.bf16.mxu0 %v603
    %932 = vmatpush1.bf16.msra.mxu0 %v602
    %933 = vmatprep.subr.bf16.mxu0 %v599
    %934 = vmatpush1.bf16.msra.mxu0 %v598
    %935 = vmatprep.subr.bf16.mxu0 %v595
    %936 = vmatpush1.bf16.msra.mxu0 %v594
    %937 = vmatprep.subr.bf16.mxu0 %v591
    %938 = vmatpush1.bf16.msra.mxu0 %v590
    %939 = vmatprep.subr.bf16.mxu0 %v587
    %940 = vmatpush1.bf16.msra.mxu0 %v586
    %941 = vmatprep.subr.bf16.mxu0 0
    %942 = vmatpush2.bf16.msra.mxu0 0
    %943 = vmatprep.subr.bf16.mxu0 0
    %944 = vmatpush2.bf16.msra.mxu0 0
    %945 = vmatprep.subr.bf16.mxu0 0
    %946 = vmatpush2.bf16.msra.mxu0 0
    %947 = vmatprep.subr.bf16.mxu0 0
    %948 = vmatpush2.bf16.msra.mxu0 0
    %949 = vmatprep.subr.bf16.mxu0 0
    %950 = vmatpush2.bf16.msra.mxu0 0
    %951 = vmatprep.subr.bf16.mxu0 0
    %952 = vmatpush2.bf16.msra.mxu0 0
    %953 = vmatprep.subr.bf16.mxu0 0
    %954 = vmatpush2.bf16.msra.mxu0 0
    %955 = vmatprep.subr.bf16.mxu0 0
    %956 = vmatpush2.bf16.msra.mxu0 0
    %957 = vmatprep.mubr.bf16.mxu0 0
    %958 = vmatmul.mubr.bf16.gmra.mxu0 %v883
    %v959 = vpop.f32.mrf.mxu0
    %v960 = vadd.f32 0.0, %v959
    %v961 = vpop.f32.mrf.mxu0
    %v962 = vadd.f32 0.0, %v961
    %v963 = vpop.f32.mrf.mxu0
    %v964 = vpop.f32.mrf.mxu0
    %965 = vdwg.mxu0
    %v966 = vadd.f32 %v879, %v919
    %v967 = vadd.f32 %v880, %v921
    %v968 = vadd.f32 %v881, %v960
    %v969 = vadd.f32 %v882, %v962
    %v970 = vxor.u32 %v966, 2147483648
    %v971 = vmul.f32 %v970, 1.442695
    %v972 = vpow.pop %v971
    %v973 = vadd.f32 %v972, 1.0
    %v974 = vrcp.pop %v973
    %v975 = vmul.f32 1.0, %v974
    %v976 = vxor.u32 %v967, 2147483648
    %v977 = vmul.f32 %v976, 1.442695
    %v978 = vpow.pop %v977
    %v979 = vadd.f32 %v978, 1.0
    %v980 = vrcp.pop %v979
    %v981 = vmul.f32 1.0, %v980
    %v982 = vtanh.pop %v968
    %v983 = vxor.u32 %v969, 2147483648
    %v984 = vmul.f32 %v983, 1.442695
    %v985 = vpow.pop %v984
    %v986 = vadd.f32 %v985, 1.0
    %v987 = vrcp.pop %v986
    %v988 = vmul.f32 1.0, %v987
    %v989 = vmul.f32 %v981, %v873
    %v990 = vmul.f32 %v975, %v982
    %v991 = vadd.f32 %v989, %v990
    %v992 = vtanh.pop %v991
    %v993 = vmul.f32 %v988, %v992
    %s994 = smul.u32 3, 4
    %s995 = smul.addr %s994, 8
    %s996 = scalar_lea.vmem [#allocation2], %s995
    %v997 = vld [vmem:[%s996] sm:$0xff]
    %v998 = vld [vmem:[%s996 + $0x8] sm:$0xff]
    %v999 = vld [vmem:[%s996 + $0x10] sm:$0xff]
    %v1000 = vld [vmem:[%s996 + $0x18] sm:$0xff]
    %v1001 = vpack.c.bf16 %v993, %v993
    %1002 = vmatprep.subr.bf16.mxu0 %v613
    %1003 = vmatpush1.bf16.msra.mxu0 %v612
    %1004 = vmatprep.subr.bf16.mxu0 %v609
    %1005 = vmatpush1.bf16.msra.mxu0 %v608
    %1006 = vmatprep.subr.bf16.mxu0 %v605
    %1007 = vmatpush1.bf16.msra.mxu0 %v604
    %1008 = vmatprep.subr.bf16.mxu0 %v601
    %1009 = vmatpush1.bf16.msra.mxu0 %v600
    %1010 = vmatprep.subr.bf16.mxu0 %v597
    %1011 = vmatpush1.bf16.msra.mxu0 %v596
    %1012 = vmatprep.subr.bf16.mxu0 %v593
    %1013 = vmatpush1.bf16.msra.mxu0 %v592
    %1014 = vmatprep.subr.bf16.mxu0 %v589
    %1015 = vmatpush1.bf16.msra.mxu0 %v588
    %1016 = vmatprep.subr.bf16.mxu0 %v585
    %1017 = vmatpush1.bf16.msra.mxu0 %v584
    %1018 = vmatprep.subr.bf16.mxu0 0
    %1019 = vmatpush2.bf16.msra.mxu0 0
    %1020 = vmatprep.subr.bf16.mxu0 0
    %1021 = vmatpush2.bf16.msra.mxu0 0
    %1022 = vmatprep.subr.bf16.mxu0 0
    %1023 = vmatpush2.bf16.msra.mxu0 0
    %1024 = vmatprep.subr.bf16.mxu0 0
    %1025 = vmatpush2.bf16.msra.mxu0 0
    %1026 = vmatprep.subr.bf16.mxu0 0
    %1027 = vmatpush2.bf16.msra.mxu0 0
    %1028 = vmatprep.subr.bf16.mxu0 0
    %1029 = vmatpush2.bf16.msra.mxu0 0
    %1030 = vmatprep.subr.bf16.mxu0 0
    %1031 = vmatpush2.bf16.msra.mxu0 0
    %1032 = vmatprep.subr.bf16.mxu0 0
    %1033 = vmatpush2.bf16.msra.mxu0 0
    %1034 = vmatprep.mubr.bf16.mxu0 0
    %1035 = vmatmul.mubr.bf16.gmra.mxu0 %v1001
    %v1036 = vpop.f32.mrf.mxu0
    %v1037 = vadd.f32 0.0, %v1036
    %v1038 = vpop.f32.mrf.mxu0
    %v1039 = vadd.f32 0.0, %v1038
    %v1040 = vpop.f32.mrf.mxu0
    %v1041 = vpop.f32.mrf.mxu0
    %1042 = vdwg.mxu0
    %1043 = vmatprep.subr.bf16.mxu0 %v615
    %1044 = vmatpush1.bf16.msra.mxu0 %v614
    %1045 = vmatprep.subr.bf16.mxu0 %v611
    %1046 = vmatpush1.bf16.msra.mxu0 %v610
    %1047 = vmatprep.subr.bf16.mxu0 %v607
    %1048 = vmatpush1.bf16.msra.mxu0 %v606
    %1049 = vmatprep.subr.bf16.mxu0 %v603
    %1050 = vmatpush1.bf16.msra.mxu0 %v602
    %1051 = vmatprep.subr.bf16.mxu0 %v599
    %1052 = vmatpush1.bf16.msra.mxu0 %v598
    %1053 = vmatprep.subr.bf16.mxu0 %v595
    %1054 = vmatpush1.bf16.msra.mxu0 %v594
    %1055 = vmatprep.subr.bf16.mxu0 %v591
    %1056 = vmatpush1.bf16.msra.mxu0 %v590
    %1057 = vmatprep.subr.bf16.mxu0 %v587
    %1058 = vmatpush1.bf16.msra.mxu0 %v586
    %1059 = vmatprep.subr.bf16.mxu0 0
    %1060 = vmatpush2.bf16.msra.mxu0 0
    %1061 = vmatprep.subr.bf16.mxu0 0
    %1062 = vmatpush2.bf16.msra.mxu0 0
    %1063 = vmatprep.subr.bf16.mxu0 0
    %1064 = vmatpush2.bf16.msra.mxu0 0
    %1065 = vmatprep.subr.bf16.mxu0 0
    %1066 = vmatpush2.bf16.msra.mxu0 0
    %1067 = vmatprep.subr.bf16.mxu0 0
    %1068 = vmatpush2.bf16.msra.mxu0 0
    %1069 = vmatprep.subr.bf16.mxu0 0
    %1070 = vmatpush2.bf16.msra.mxu0 0
    %1071 = vmatprep.subr.bf16.mxu0 0
    %1072 = vmatpush2.bf16.msra.mxu0 0
    %1073 = vmatprep.subr.bf16.mxu0 0
    %1074 = vmatpush2.bf16.msra.mxu0 0
    %1075 = vmatprep.mubr.bf16.mxu0 0
    %1076 = vmatmul.mubr.bf16.gmra.mxu0 %v1001
    %v1077 = vpop.f32.mrf.mxu0
    %v1078 = vadd.f32 0.0, %v1077
    %v1079 = vpop.f32.mrf.mxu0
    %v1080 = vadd.f32 0.0, %v1079
    %v1081 = vpop.f32.mrf.mxu0
    %v1082 = vpop.f32.mrf.mxu0
    %1083 = vdwg.mxu0
    %v1084 = vadd.f32 %v997, %v1037
    %v1085 = vadd.f32 %v998, %v1039
    %v1086 = vadd.f32 %v999, %v1078
    %v1087 = vadd.f32 %v1000, %v1080
    %v1088 = vxor.u32 %v1084, 2147483648
    %v1089 = vmul.f32 %v1088, 1.442695
    %v1090 = vpow.pop %v1089
    %v1091 = vadd.f32 %v1090, 1.0
    %v1092 = vrcp.pop %v1091
    %v1093 = vmul.f32 1.0, %v1092
    %v1094 = vxor.u32 %v1085, 2147483648
    %v1095 = vmul.f32 %v1094, 1.442695
    %v1096 = vpow.pop %v1095
    %v1097 = vadd.f32 %v1096, 1.0
    %v1098 = vrcp.pop %v1097
    %v1099 = vmul.f32 1.0, %v1098
    %v1100 = vtanh.pop %v1086
    %v1101 = vxor.u32 %v1087, 2147483648
    %v1102 = vmul.f32 %v1101, 1.442695
    %v1103 = vpow.pop %v1102
    %v1104 = vadd.f32 %v1103, 1.0
    %v1105 = vrcp.pop %v1104
    %v1106 = vmul.f32 1.0, %v1105
    %v1107 = vmul.f32 %v1099, %v991
    %v1108 = vmul.f32 %v1093, %v1100
    %v1109 = vadd.f32 %v1107, %v1108
    %v1110 = vtanh.pop %v1109
    %v1111 = vmul.f32 %v1106, %v1110
    %s1112 = smul.u32 4, 4
    %s1113 = smul.addr %s1112, 8
    %s1114 = scalar_lea.vmem [#allocation2], %s1113
    %v1115 = vld [vmem:[%s1114] sm:$0xff]
    %v1116 = vld [vmem:[%s1114 + $0x8] sm:$0xff]
    %v1117 = vld [vmem:[%s1114 + $0x10] sm:$0xff]
    %v1118 = vld [vmem:[%s1114 + $0x18] sm:$0xff]
    %v1119 = vpack.c.bf16 %v1111, %v1111
    %1120 = vmatprep.subr.bf16.mxu0 %v613
    %1121 = vmatpush1.bf16.msra.mxu0 %v612
    %1122 = vmatprep.subr.bf16.mxu0 %v609
    %1123 = vmatpush1.bf16.msra.mxu0 %v608
    %1124 = vmatprep.subr.bf16.mxu0 %v605
    %1125 = vmatpush1.bf16.msra.mxu0 %v604
    %1126 = vmatprep.subr.bf16.mxu0 %v601
    %1127 = vmatpush1.bf16.msra.mxu0 %v600
    %1128 = vmatprep.subr.bf16.mxu0 %v597
    %1129 = vmatpush1.bf16.msra.mxu0 %v596
    %1130 = vmatprep.subr.bf16.mxu0 %v593
    %1131 = vmatpush1.bf16.msra.mxu0 %v592
    %1132 = vmatprep.subr.bf16.mxu0 %v589
    %1133 = vmatpush1.bf16.msra.mxu0 %v588
    %1134 = vmatprep.subr.bf16.mxu0 %v585
    %1135 = vmatpush1.bf16.msra.mxu0 %v584
    %1136 = vmatprep.subr.bf16.mxu0 0
    %1137 = vmatpush2.bf16.msra.mxu0 0
    %1138 = vmatprep.subr.bf16.mxu0 0
    %1139 = vmatpush2.bf16.msra.mxu0 0
    %1140 = vmatprep.subr.bf16.mxu0 0
    %1141 = vmatpush2.bf16.msra.mxu0 0
    %1142 = vmatprep.subr.bf16.mxu0 0
    %1143 = vmatpush2.bf16.msra.mxu0 0
    %1144 = vmatprep.subr.bf16.mxu0 0
    %1145 = vmatpush2.bf16.msra.mxu0 0
    %1146 = vmatprep.subr.bf16.mxu0 0
    %1147 = vmatpush2.bf16.msra.mxu0 0
    %1148 = vmatprep.subr.bf16.mxu0 0
    %1149 = vmatpush2.bf16.msra.mxu0 0
    %1150 = vmatprep.subr.bf16.mxu0 0
    %1151 = vmatpush2.bf16.msra.mxu0 0
    %1152 = vmatprep.mubr.bf16.mxu0 0
    %1153 = vmatmul.mubr.bf16.gmra.mxu0 %v1119
    %v1154 = vpop.f32.mrf.mxu0
    %v1155 = vadd.f32 0.0, %v1154
    %v1156 = vpop.f32.mrf.mxu0
    %v1157 = vadd.f32 0.0, %v1156
    %v1158 = vpop.f32.mrf.mxu0
    %v1159 = vpop.f32.mrf.mxu0
    %1160 = vdwg.mxu0
    %1161 = vmatprep.subr.bf16.mxu0 %v615
    %1162 = vmatpush1.bf16.msra.mxu0 %v614
    %1163 = vmatprep.subr.bf16.mxu0 %v611
    %1164 = vmatpush1.bf16.msra.mxu0 %v610
    %1165 = vmatprep.subr.bf16.mxu0 %v607
    %1166 = vmatpush1.bf16.msra.mxu0 %v606
    %1167 = vmatprep.subr.bf16.mxu0 %v603
    %1168 = vmatpush1.bf16.msra.mxu0 %v602
    %1169 = vmatprep.subr.bf16.mxu0 %v599
    %1170 = vmatpush1.bf16.msra.mxu0 %v598
    %1171 = vmatprep.subr.bf16.mxu0 %v595
    %1172 = vmatpush1.bf16.msra.mxu0 %v594
    %1173 = vmatprep.subr.bf16.mxu0 %v591
    %1174 = vmatpush1.bf16.msra.mxu0 %v590
    %1175 = vmatprep.subr.bf16.mxu0 %v587
    %1176 = vmatpush1.bf16.msra.mxu0 %v586
    %1177 = vmatprep.subr.bf16.mxu0 0
    %1178 = vmatpush2.bf16.msra.mxu0 0
    %1179 = vmatprep.subr.bf16.mxu0 0
    %1180 = vmatpush2.bf16.msra.mxu0 0
    %1181 = vmatprep.subr.bf16.mxu0 0
    %1182 = vmatpush2.bf16.msra.mxu0 0
    %1183 = vmatprep.subr.bf16.mxu0 0
    %1184 = vmatpush2.bf16.msra.mxu0 0
    %1185 = vmatprep.subr.bf16.mxu0 0
    %1186 = vmatpush2.bf16.msra.mxu0 0
    %1187 = vmatprep.subr.bf16.mxu0 0
    %1188 = vmatpush2.bf16.msra.mxu0 0
    %1189 = vmatprep.subr.bf16.mxu0 0
    %1190 = vmatpush2.bf16.msra.mxu0 0
    %1191 = vmatprep.subr.bf16.mxu0 0
    %1192 = vmatpush2.bf16.msra.mxu0 0
    %1193 = vmatprep.mubr.bf16.mxu0 0
    %1194 = vmatmul.mubr.bf16.gmra.mxu0 %v1119
    %v1195 = vpop.f32.mrf.mxu0
    %v1196 = vadd.f32 0.0, %v1195
    %v1197 = vpop.f32.mrf.mxu0
    %v1198 = vadd.f32 0.0, %v1197
    %v1199 = vpop.f32.mrf.mxu0
    %v1200 = vpop.f32.mrf.mxu0
    %1201 = vdwg.mxu0
    %v1202 = vadd.f32 %v1115, %v1155
    %v1203 = vadd.f32 %v1116, %v1157
    %v1204 = vadd.f32 %v1117, %v1196
    %v1205 = vadd.f32 %v1118, %v1198
    %v1206 = vxor.u32 %v1202, 2147483648
    %v1207 = vmul.f32 %v1206, 1.442695
    %v1208 = vpow.pop %v1207
    %v1209 = vadd.f32 %v1208, 1.0
    %v1210 = vrcp.pop %v1209
    %v1211 = vmul.f32 1.0, %v1210
    %v1212 = vxor.u32 %v1203, 2147483648
    %v1213 = vmul.f32 %v1212, 1.442695
    %v1214 = vpow.pop %v1213
    %v1215 = vadd.f32 %v1214, 1.0
    %v1216 = vrcp.pop %v1215
    %v1217 = vmul.f32 1.0, %v1216
    %v1218 = vtanh.pop %v1204
    %v1219 = vxor.u32 %v1205, 2147483648
    %v1220 = vmul.f32 %v1219, 1.442695
    %v1221 = vpow.pop %v1220
    %v1222 = vadd.f32 %v1221, 1.0
    %v1223 = vrcp.pop %v1222
    %v1224 = vmul.f32 1.0, %v1223
    %v1225 = vmul.f32 %v1217, %v1109
    %v1226 = vmul.f32 %v1211, %v1218
    %v1227 = vadd.f32 %v1225, %v1226
    %v1228 = vtanh.pop %v1227
    %v1229 = vmul.f32 %v1224, %v1228
    %s1230 = smul.u32 5, 4
    %s1231 = smul.addr %s1230, 8
    %s1232 = scalar_lea.vmem [#allocation2], %s1231
    %v1233 = vld [vmem:[%s1232] sm:$0xff]
    %v1234 = vld [vmem:[%s1232 + $0x8] sm:$0xff]
    %v1235 = vld [vmem:[%s1232 + $0x10] sm:$0xff]
    %v1236 = vld [vmem:[%s1232 + $0x18] sm:$0xff]
    %v1237 = vpack.c.bf16 %v1229, %v1229
    %1238 = vmatprep.subr.bf16.mxu0 %v613
    %1239 = vmatpush1.bf16.msra.mxu0 %v612
    %1240 = vmatprep.subr.bf16.mxu0 %v609
    %1241 = vmatpush1.bf16.msra.mxu0 %v608
    %1242 = vmatprep.subr.bf16.mxu0 %v605
    %1243 = vmatpush1.bf16.msra.mxu0 %v604
    %1244 = vmatprep.subr.bf16.mxu0 %v601
    %1245 = vmatpush1.bf16.msra.mxu0 %v600
    %1246 = vmatprep.subr.bf16.mxu0 %v597
    %1247 = vmatpush1.bf16.msra.mxu0 %v596
    %1248 = vmatprep.subr.bf16.mxu0 %v593
    %1249 = vmatpush1.bf16.msra.mxu0 %v592
    %1250 = vmatprep.subr.bf16.mxu0 %v589
    %1251 = vmatpush1.bf16.msra.mxu0 %v588
    %1252 = vmatprep.subr.bf16.mxu0 %v585
    %1253 = vmatpush1.bf16.msra.mxu0 %v584
    %1254 = vmatprep.subr.bf16.mxu0 0
    %1255 = vmatpush2.bf16.msra.mxu0 0
    %1256 = vmatprep.subr.bf16.mxu0 0
    %1257 = vmatpush2.bf16.msra.mxu0 0
    %1258 = vmatprep.subr.bf16.mxu0 0
    %1259 = vmatpush2.bf16.msra.mxu0 0
    %1260 = vmatprep.subr.bf16.mxu0 0
    %1261 = vmatpush2.bf16.msra.mxu0 0
    %1262 = vmatprep.subr.bf16.mxu0 0
    %1263 = vmatpush2.bf16.msra.mxu0 0
    %1264 = vmatprep.subr.bf16.mxu0 0
    %1265 = vmatpush2.bf16.msra.mxu0 0
    %1266 = vmatprep.subr.bf16.mxu0 0
    %1267 = vmatpush2.bf16.msra.mxu0 0
    %1268 = vmatprep.subr.bf16.mxu0 0
    %1269 = vmatpush2.bf16.msra.mxu0 0
    %1270 = vmatprep.mubr.bf16.mxu0 0
    %1271 = vmatmul.mubr.bf16.gmra.mxu0 %v1237
    %v1272 = vpop.f32.mrf.mxu0
    %v1273 = vadd.f32 0.0, %v1272
    %v1274 = vpop.f32.mrf.mxu0
    %v1275 = vadd.f32 0.0, %v1274
    %v1276 = vpop.f32.mrf.mxu0
    %v1277 = vpop.f32.mrf.mxu0
    %1278 = vdwg.mxu0
    %1279 = vmatprep.subr.bf16.mxu0 %v615
    %1280 = vmatpush1.bf16.msra.mxu0 %v614
    %1281 = vmatprep.subr.bf16.mxu0 %v611
    %1282 = vmatpush1.bf16.msra.mxu0 %v610
    %1283 = vmatprep.subr.bf16.mxu0 %v607
    %1284 = vmatpush1.bf16.msra.mxu0 %v606
    %1285 = vmatprep.subr.bf16.mxu0 %v603
    %1286 = vmatpush1.bf16.msra.mxu0 %v602
    %1287 = vmatprep.subr.bf16.mxu0 %v599
    %1288 = vmatpush1.bf16.msra.mxu0 %v598
    %1289 = vmatprep.subr.bf16.mxu0 %v595
    %1290 = vmatpush1.bf16.msra.mxu0 %v594
    %1291 = vmatprep.subr.bf16.mxu0 %v591
    %1292 = vmatpush1.bf16.msra.mxu0 %v590
    %1293 = vmatprep.subr.bf16.mxu0 %v587
    %1294 = vmatpush1.bf16.msra.mxu0 %v586
    %1295 = vmatprep.subr.bf16.mxu0 0
    %1296 = vmatpush2.bf16.msra.mxu0 0
    %1297 = vmatprep.subr.bf16.mxu0 0
    %1298 = vmatpush2.bf16.msra.mxu0 0
    %1299 = vmatprep.subr.bf16.mxu0 0
    %1300 = vmatpush2.bf16.msra.mxu0 0
    %1301 = vmatprep.subr.bf16.mxu0 0
    %1302 = vmatpush2.bf16.msra.mxu0 0
    %1303 = vmatprep.subr.bf16.mxu0 0
    %1304 = vmatpush2.bf16.msra.mxu0 0
    %1305 = vmatprep.subr.bf16.mxu0 0
    %1306 = vmatpush2.bf16.msra.mxu0 0
    %1307 = vmatprep.subr.bf16.mxu0 0
    %1308 = vmatpush2.bf16.msra.mxu0 0
    %1309 = vmatprep.subr.bf16.mxu0 0
    %1310 = vmatpush2.bf16.msra.mxu0 0
    %1311 = vmatprep.mubr.bf16.mxu0 0
    %1312 = vmatmul.mubr.bf16.gmra.mxu0 %v1237
    %v1313 = vpop.f32.mrf.mxu0
    %v1314 = vadd.f32 0.0, %v1313
    %v1315 = vpop.f32.mrf.mxu0
    %v1316 = vadd.f32 0.0, %v1315
    %v1317 = vpop.f32.mrf.mxu0
    %v1318 = vpop.f32.mrf.mxu0
    %1319 = vdwg.mxu0
    %v1320 = vadd.f32 %v1233, %v1273
    %v1321 = vadd.f32 %v1234, %v1275
    %v1322 = vadd.f32 %v1235, %v1314
    %v1323 = vadd.f32 %v1236, %v1316
    %v1324 = vxor.u32 %v1320, 2147483648
    %v1325 = vmul.f32 %v1324, 1.442695
    %v1326 = vpow.pop %v1325
    %v1327 = vadd.f32 %v1326, 1.0
    %v1328 = vrcp.pop %v1327
    %v1329 = vmul.f32 1.0, %v1328
    %v1330 = vxor.u32 %v1321, 2147483648
    %v1331 = vmul.f32 %v1330, 1.442695
    %v1332 = vpow.pop %v1331
    %v1333 = vadd.f32 %v1332, 1.0
    %v1334 = vrcp.pop %v1333
    %v1335 = vmul.f32 1.0, %v1334
    %v1336 = vtanh.pop %v1322
    %v1337 = vxor.u32 %v1323, 2147483648
    %v1338 = vmul.f32 %v1337, 1.442695
    %v1339 = vpow.pop %v1338
    %v1340 = vadd.f32 %v1339, 1.0
    %v1341 = vrcp.pop %v1340
    %v1342 = vmul.f32 1.0, %v1341
    %v1343 = vmul.f32 %v1335, %v1227
    %v1344 = vmul.f32 %v1329, %v1336
    %v1345 = vadd.f32 %v1343, %v1344
    %v1346 = vtanh.pop %v1345
    %v1347 = vmul.f32 %v1342, %v1346
    %s1348 = smul.u32 6, 4
    %s1349 = smul.addr %s1348, 8
    %s1350 = scalar_lea.vmem [#allocation2], %s1349
    %v1351 = vld [vmem:[%s1350] sm:$0xff]
    %v1352 = vld [vmem:[%s1350 + $0x8] sm:$0xff]
    %v1353 = vld [vmem:[%s1350 + $0x10] sm:$0xff]
    %v1354 = vld [vmem:[%s1350 + $0x18] sm:$0xff]
    %v1355 = vpack.c.bf16 %v1347, %v1347
    %1356 = vmatprep.subr.bf16.mxu0 %v613
    %1357 = vmatpush1.bf16.msra.mxu0 %v612
    %1358 = vmatprep.subr.bf16.mxu0 %v609
    %1359 = vmatpush1.bf16.msra.mxu0 %v608
    %1360 = vmatprep.subr.bf16.mxu0 %v605
    %1361 = vmatpush1.bf16.msra.mxu0 %v604
    %1362 = vmatprep.subr.bf16.mxu0 %v601
    %1363 = vmatpush1.bf16.msra.mxu0 %v600
    %1364 = vmatprep.subr.bf16.mxu0 %v597
    %1365 = vmatpush1.bf16.msra.mxu0 %v596
    %1366 = vmatprep.subr.bf16.mxu0 %v593
    %1367 = vmatpush1.bf16.msra.mxu0 %v592
    %1368 = vmatprep.subr.bf16.mxu0 %v589
    %1369 = vmatpush1.bf16.msra.mxu0 %v588
    %1370 = vmatprep.subr.bf16.mxu0 %v585
    %1371 = vmatpush1.bf16.msra.mxu0 %v584
    %1372 = vmatprep.subr.bf16.mxu0 0
    %1373 = vmatpush2.bf16.msra.mxu0 0
    %1374 = vmatprep.subr.bf16.mxu0 0
    %1375 = vmatpush2.bf16.msra.mxu0 0
    %1376 = vmatprep.subr.bf16.mxu0 0
    %1377 = vmatpush2.bf16.msra.mxu0 0
    %1378 = vmatprep.subr.bf16.mxu0 0
    %1379 = vmatpush2.bf16.msra.mxu0 0
    %1380 = vmatprep.subr.bf16.mxu0 0
    %1381 = vmatpush2.bf16.msra.mxu0 0
    %1382 = vmatprep.subr.bf16.mxu0 0
    %1383 = vmatpush2.bf16.msra.mxu0 0
    %1384 = vmatprep.subr.bf16.mxu0 0
    %1385 = vmatpush2.bf16.msra.mxu0 0
    %1386 = vmatprep.subr.bf16.mxu0 0
    %1387 = vmatpush2.bf16.msra.mxu0 0
    %1388 = vmatprep.mubr.bf16.mxu0 0
    %1389 = vmatmul.mubr.bf16.gmra.mxu0 %v1355
    %v1390 = vpop.f32.mrf.mxu0
    %v1391 = vadd.f32 0.0, %v1390
    %v1392 = vpop.f32.mrf.mxu0
    %v1393 = vadd.f32 0.0, %v1392
    %v1394 = vpop.f32.mrf.mxu0
    %v1395 = vpop.f32.mrf.mxu0
    %1396 = vdwg.mxu0
    %1397 = vmatprep.subr.bf16.mxu0 %v615
    %1398 = vmatpush1.bf16.msra.mxu0 %v614
    %1399 = vmatprep.subr.bf16.mxu0 %v611
    %1400 = vmatpush1.bf16.msra.mxu0 %v610
    %1401 = vmatprep.subr.bf16.mxu0 %v607
    %1402 = vmatpush1.bf16.msra.mxu0 %v606
    %1403 = vmatprep.subr.bf16.mxu0 %v603
    %1404 = vmatpush1.bf16.msra.mxu0 %v602
    %1405 = vmatprep.subr.bf16.mxu0 %v599
    %1406 = vmatpush1.bf16.msra.mxu0 %v598
    %1407 = vmatprep.subr.bf16.mxu0 %v595
    %1408 = vmatpush1.bf16.msra.mxu0 %v594
    %1409 = vmatprep.subr.bf16.mxu0 %v591
    %1410 = vmatpush1.bf16.msra.mxu0 %v590
    %1411 = vmatprep.subr.bf16.mxu0 %v587
    %1412 = vmatpush1.bf16.msra.mxu0 %v586
    %1413 = vmatprep.subr.bf16.mxu0 0
    %1414 = vmatpush2.bf16.msra.mxu0 0
    %1415 = vmatprep.subr.bf16.mxu0 0
    %1416 = vmatpush2.bf16.msra.mxu0 0
    %1417 = vmatprep.subr.bf16.mxu0 0
    %1418 = vmatpush2.bf16.msra.mxu0 0
    %1419 = vmatprep.subr.bf16.mxu0 0
    %1420 = vmatpush2.bf16.msra.mxu0 0
    %1421 = vmatprep.subr.bf16.mxu0 0
    %1422 = vmatpush2.bf16.msra.mxu0 0
    %1423 = vmatprep.subr.bf16.mxu0 0
    %1424 = vmatpush2.bf16.msra.mxu0 0
    %1425 = vmatprep.subr.bf16.mxu0 0
    %1426 = vmatpush2.bf16.msra.mxu0 0
    %1427 = vmatprep.subr.bf16.mxu0 0
    %1428 = vmatpush2.bf16.msra.mxu0 0
    %1429 = vmatprep.mubr.bf16.mxu0 0
    %1430 = vmatmul.mubr.bf16.gmra.mxu0 %v1355
    %v1431 = vpop.f32.mrf.mxu0
    %v1432 = vadd.f32 0.0, %v1431
    %v1433 = vpop.f32.mrf.mxu0
    %v1434 = vadd.f32 0.0, %v1433
    %v1435 = vpop.f32.mrf.mxu0
    %v1436 = vpop.f32.mrf.mxu0
    %1437 = vdwg.mxu0
    %v1438 = vadd.f32 %v1351, %v1391
    %v1439 = vadd.f32 %v1352, %v1393
    %v1440 = vadd.f32 %v1353, %v1432
    %v1441 = vadd.f32 %v1354, %v1434
    %v1442 = vxor.u32 %v1438, 2147483648
    %v1443 = vmul.f32 %v1442, 1.442695
    %v1444 = vpow.pop %v1443
    %v1445 = vadd.f32 %v1444, 1.0
    %v1446 = vrcp.pop %v1445
    %v1447 = vmul.f32 1.0, %v1446
    %v1448 = vxor.u32 %v1439, 2147483648
    %v1449 = vmul.f32 %v1448, 1.442695
    %v1450 = vpow.pop %v1449
    %v1451 = vadd.f32 %v1450, 1.0
    %v1452 = vrcp.pop %v1451
    %v1453 = vmul.f32 1.0, %v1452
    %v1454 = vtanh.pop %v1440
    %v1455 = vxor.u32 %v1441, 2147483648
    %v1456 = vmul.f32 %v1455, 1.442695
    %v1457 = vpow.pop %v1456
    %v1458 = vadd.f32 %v1457, 1.0
    %v1459 = vrcp.pop %v1458
    %v1460 = vmul.f32 1.0, %v1459
    %v1461 = vmul.f32 %v1453, %v1345
    %v1462 = vmul.f32 %v1447, %v1454
    %v1463 = vadd.f32 %v1461, %v1462
    %v1464 = vtanh.pop %v1463
    %v1465 = vmul.f32 %v1460, %v1464
    %s1466 = smul.u32 7, 4
    %s1467 = smul.addr %s1466, 8
    %s1468 = scalar_lea.vmem [#allocation2], %s1467
    %v1469 = vld [vmem:[%s1468] sm:$0xff]
    %v1470 = vld [vmem:[%s1468 + $0x8] sm:$0xff]
    %v1471 = vld [vmem:[%s1468 + $0x10] sm:$0xff]
    %v1472 = vld [vmem:[%s1468 + $0x18] sm:$0xff]
    %v1473 = vpack.c.bf16 %v1465, %v1465
    %1474 = vmatprep.subr.bf16.mxu0 %v613
    %1475 = vmatpush1.bf16.msra.mxu0 %v612
    %1476 = vmatprep.subr.bf16.mxu0 %v609
    %1477 = vmatpush1.bf16.msra.mxu0 %v608
    %1478 = vmatprep.subr.bf16.mxu0 %v605
    %1479 = vmatpush1.bf16.msra.mxu0 %v604
    %1480 = vmatprep.subr.bf16.mxu0 %v601
    %1481 = vmatpush1.bf16.msra.mxu0 %v600
    %1482 = vmatprep.subr.bf16.mxu0 %v597
    %1483 = vmatpush1.bf16.msra.mxu0 %v596
    %1484 = vmatprep.subr.bf16.mxu0 %v593
    %1485 = vmatpush1.bf16.msra.mxu0 %v592
    %1486 = vmatprep.subr.bf16.mxu0 %v589
    %1487 = vmatpush1.bf16.msra.mxu0 %v588
    %1488 = vmatprep.subr.bf16.mxu0 %v585
    %1489 = vmatpush1.bf16.msra.mxu0 %v584
    %1490 = vmatprep.subr.bf16.mxu0 0
    %1491 = vmatpush2.bf16.msra.mxu0 0
    %1492 = vmatprep.subr.bf16.mxu0 0
    %1493 = vmatpush2.bf16.msra.mxu0 0
    %1494 = vmatprep.subr.bf16.mxu0 0
    %1495 = vmatpush2.bf16.msra.mxu0 0
    %1496 = vmatprep.subr.bf16.mxu0 0
    %1497 = vmatpush2.bf16.msra.mxu0 0
    %1498 = vmatprep.subr.bf16.mxu0 0
    %1499 = vmatpush2.bf16.msra.mxu0 0
    %1500 = vmatprep.subr.bf16.mxu0 0
    %1501 = vmatpush2.bf16.msra.mxu0 0
    %1502 = vmatprep.subr.bf16.mxu0 0
    %1503 = vmatpush2.bf16.msra.mxu0 0
    %1504 = vmatprep.subr.bf16.mxu0 0
    %1505 = vmatpush2.bf16.msra.mxu0 0
    %1506 = vmatprep.mubr.bf16.mxu0 0
    %1507 = vmatmul.mubr.bf16.gmra.mxu0 %v1473
    %v1508 = vpop.f32.mrf.mxu0
    %v1509 = vadd.f32 0.0, %v1508
    %v1510 = vpop.f32.mrf.mxu0
    %v1511 = vadd.f32 0.0, %v1510
    %v1512 = vpop.f32.mrf.mxu0
    %v1513 = vpop.f32.mrf.mxu0
    %1514 = vdwg.mxu0
    %1515 = vmatprep.subr.bf16.mxu0 %v615
    %1516 = vmatpush1.bf16.msra.mxu0 %v614
    %1517 = vmatprep.subr.bf16.mxu0 %v611
    %1518 = vmatpush1.bf16.msra.mxu0 %v610
    %1519 = vmatprep.subr.bf16.mxu0 %v607
    %1520 = vmatpush1.bf16.msra.mxu0 %v606
    %1521 = vmatprep.subr.bf16.mxu0 %v603
    %1522 = vmatpush1.bf16.msra.mxu0 %v602
    %1523 = vmatprep.subr.bf16.mxu0 %v599
    %1524 = vmatpush1.bf16.msra.mxu0 %v598
    %1525 = vmatprep.subr.bf16.mxu0 %v595
    %1526 = vmatpush1.bf16.msra.mxu0 %v594
    %1527 = vmatprep.subr.bf16.mxu0 %v591
    %1528 = vmatpush1.bf16.msra.mxu0 %v590
    %1529 = vmatprep.subr.bf16.mxu0 %v587
    %1530 = vmatpush1.bf16.msra.mxu0 %v586
    %1531 = vmatprep.subr.bf16.mxu0 0
    %1532 = vmatpush2.bf16.msra.mxu0 0
    %1533 = vmatprep.subr.bf16.mxu0 0
    %1534 = vmatpush2.bf16.msra.mxu0 0
    %1535 = vmatprep.subr.bf16.mxu0 0
    %1536 = vmatpush2.bf16.msra.mxu0 0
    %1537 = vmatprep.subr.bf16.mxu0 0
    %1538 = vmatpush2.bf16.msra.mxu0 0
    %1539 = vmatprep.subr.bf16.mxu0 0
    %1540 = vmatpush2.bf16.msra.mxu0 0
    %1541 = vmatprep.subr.bf16.mxu0 0
    %1542 = vmatpush2.bf16.msra.mxu0 0
    %1543 = vmatprep.subr.bf16.mxu0 0
    %1544 = vmatpush2.bf16.msra.mxu0 0
    %1545 = vmatprep.subr.bf16.mxu0 0
    %1546 = vmatpush2.bf16.msra.mxu0 0
    %1547 = vmatprep.mubr.bf16.mxu0 0
    %1548 = vmatmul.mubr.bf16.gmra.mxu0 %v1473
    %v1549 = vpop.f32.mrf.mxu0
    %v1550 = vadd.f32 0.0, %v1549
    %v1551 = vpop.f32.mrf.mxu0
    %v1552 = vadd.f32 0.0, %v1551
    %v1553 = vpop.f32.mrf.mxu0
    %v1554 = vpop.f32.mrf.mxu0
    %1555 = vdwg.mxu0
    %v1556 = vadd.f32 %v1469, %v1509
    %v1557 = vadd.f32 %v1470, %v1511
    %v1558 = vadd.f32 %v1471, %v1550
    %v1559 = vadd.f32 %v1472, %v1552
    %v1560 = vxor.u32 %v1556, 2147483648
    %v1561 = vmul.f32 %v1560, 1.442695
    %v1562 = vpow.pop %v1561
    %v1563 = vadd.f32 %v1562, 1.0
    %v1564 = vrcp.pop %v1563
    %v1565 = vmul.f32 1.0, %v1564
    %v1566 = vxor.u32 %v1557, 2147483648
    %v1567 = vmul.f32 %v1566, 1.442695
    %v1568 = vpow.pop %v1567
    %v1569 = vadd.f32 %v1568, 1.0
    %v1570 = vrcp.pop %v1569
    %v1571 = vmul.f32 1.0, %v1570
    %v1572 = vtanh.pop %v1558
    %v1573 = vxor.u32 %v1559, 2147483648
    %v1574 = vmul.f32 %v1573, 1.442695
    %v1575 = vpow.pop %v1574
    %v1576 = vadd.f32 %v1575, 1.0
    %v1577 = vrcp.pop %v1576
    %v1578 = vmul.f32 1.0, %v1577
    %v1579 = vmul.f32 %v1571, %v1463
    %v1580 = vmul.f32 %v1565, %v1572
    %v1581 = vadd.f32 %v1579, %v1580
    %v1582 = vtanh.pop %v1581
    %v1583 = vmul.f32 %v1578, %v1582
    %v1584 = vpack.c.bf16 %v1583, %v1583
    %v1585 = vld [vmem:[%s4] sm:$0xf]
    %v1586 = vld [vmem:[%s4 + $0x4] sm:$0xf]
    %v1587 = vld [vmem:[%s4 + $0x8] sm:$0xf]
    %v1588 = vld [vmem:[%s4 + $0xc] sm:$0xf]
    %v1589 = vld [vmem:[%s4 + $0x10] sm:$0xf]
    %v1590 = vld [vmem:[%s4 + $0x14] sm:$0xf]
    %v1591 = vld [vmem:[%s4 + $0x18] sm:$0xf]
    %v1592 = vld [vmem:[%s4 + $0x1c] sm:$0xf]
    %v1593 = vld [vmem:[%s4 + $0x20] sm:$0xf]
    %v1594 = vld [vmem:[%s4 + $0x24] sm:$0xf]
    %v1595 = vld [vmem:[%s4 + $0x28] sm:$0xf]
    %v1596 = vld [vmem:[%s4 + $0x2c] sm:$0xf]
    %v1597 = vld [vmem:[%s4 + $0x30] sm:$0xf]
    %v1598 = vld [vmem:[%s4 + $0x34] sm:$0xf]
    %v1599 = vld [vmem:[%s4 + $0x38] sm:$0xf]
    %v1600 = vld [vmem:[%s4 + $0x3c] sm:$0xf]
    %v1601 = vld [vmem:[%s5] sm:$0x1]
    %v1603 = vlaneseq
    %v1604 = vshrl.u32 %v1603, 7
    %v1605 = vsub.s32 0, %v1604
    %v1606 = vrot.slane %v1601, %v1605
    %v1624 = vunpack.c.l.b16 %v1585
    %v1625 = vunpack.c.l.b16 %v1586
    %v1626 = vunpack.c.l.b16 %v1587
    %v1627 = vunpack.c.l.b16 %v1588
    %v1628 = vunpack.c.l.b16 %v1589
    %v1629 = vunpack.c.l.b16 %v1590
    %v1630 = vunpack.c.l.b16 %v1591
    %v1631 = vunpack.c.l.b16 %v1592
    %v1632 = vunpack.c.l.b16 %v1593
    %v1633 = vunpack.c.l.b16 %v1594
    %v1634 = vunpack.c.l.b16 %v1595
    %v1635 = vunpack.c.l.b16 %v1596
    %v1636 = vunpack.c.l.b16 %v1597
    %v1637 = vunpack.c.l.b16 %v1598
    %v1638 = vunpack.c.l.b16 %v1599
    %v1639 = vunpack.c.l.b16 %v1600
    %v1640 = vpack.c.b16 %v1625, %v1624
    %v1641 = vpack.c.b16 %v1627, %v1626
    %v1642 = vpack.c.b16 %v1629, %v1628
    %v1643 = vpack.c.b16 %v1631, %v1630
    %v1644 = vpack.c.b16 %v1633, %v1632
    %v1645 = vpack.c.b16 %v1635, %v1634
    %v1646 = vpack.c.b16 %v1637, %v1636
    %v1647 = vpack.c.b16 %v1639, %v1638
    %1656 = vmatprep.subr.bf16.mxu0 0
    %1657 = vmatpush1.bf16.msra.mxu0 %v1647
    %1658 = vmatprep.subr.bf16.mxu0 0
    %1659 = vmatpush1.bf16.msra.mxu0 %v1646
    %1660 = vmatprep.subr.bf16.mxu0 0
    %1661 = vmatpush1.bf16.msra.mxu0 %v1645
    %1662 = vmatprep.subr.bf16.mxu0 0
    %1663 = vmatpush1.bf16.msra.mxu0 %v1644
    %1664 = vmatprep.subr.bf16.mxu0 0
    %1665 = vmatpush1.bf16.msra.mxu0 %v1643
    %1666 = vmatprep.subr.bf16.mxu0 0
    %1667 = vmatpush1.bf16.msra.mxu0 %v1642
    %1668 = vmatprep.subr.bf16.mxu0 0
    %1669 = vmatpush1.bf16.msra.mxu0 %v1641
    %1670 = vmatprep.subr.bf16.mxu0 0
    %1671 = vmatpush1.bf16.msra.mxu0 %v1640
    %1672 = vmatprep.subr.bf16.mxu0 0
    %1673 = vmatpush2.bf16.msra.mxu0 0
    %1674 = vmatprep.subr.bf16.mxu0 0
    %1675 = vmatpush2.bf16.msra.mxu0 0
    %1676 = vmatprep.subr.bf16.mxu0 0
    %1677 = vmatpush2.bf16.msra.mxu0 0
    %1678 = vmatprep.subr.bf16.mxu0 0
    %1679 = vmatpush2.bf16.msra.mxu0 0
    %1680 = vmatprep.subr.bf16.mxu0 0
    %1681 = vmatpush2.bf16.msra.mxu0 0
    %1682 = vmatprep.subr.bf16.mxu0 0
    %1683 = vmatpush2.bf16.msra.mxu0 0
    %1684 = vmatprep.subr.bf16.mxu0 0
    %1685 = vmatpush2.bf16.msra.mxu0 0
    %1686 = vmatprep.subr.bf16.mxu0 0
    %1687 = vmatpush2.bf16.msra.mxu0 0
    %1688 = vmatprep.mubr.bf16.mxu0 0
    %1689 = vmatmul.mubr.bf16.gmra.mxu0 %v1584
    %v1690 = vpop.f32.mrf.mxu0
    %v1691 = vadd.f32 %v1606, %v1690
    %v1692 = vpop.f32.mrf.mxu0
    %v1693 = vpop.f32.mrf.mxu0
    %v1694 = vpop.f32.mrf.mxu0
    %1695 = vdwg.mxu0
    %1696 = vst [vmem:[#allocation3] sm:$0xff] %v1691
    // Predicated region
    $region26: #{lstm_glove_forward.1} parent=1 // pred_check
      _
    $region27: #{lstm_glove_forward.1} parent=1 // pred_check_branch
      %1698 = sbr.rel (0) target = $region29
    $region28: #{lstm_glove_forward.1} parent=1 // pred_region
      %s1700 = ssub.s32 128, 128
      %1701 = vsyncadd [#allocation4], %s1700
      %s1703 = sshll.u32 [#allocation3], 4
      %s1704 = int_to_ptr.vmem [resolvable:$true] %s1703
      %1706 = dma.vmem_to_hbm [thread:$0]  %s1704, 128, %s6, [#allocation4]
    $region29: #{lstm_glove_forward.1} parent=1 // pred_fallthru
      _
    // Predicated region
    $region30: #{lstm_glove_forward.1} parent=1 // pred_check
      _
    $region31: #{lstm_glove_forward.1} parent=1 // pred_check_branch
      %1708 = sbr.rel (0) target = $region33
    $region32: #{lstm_glove_forward.1} parent=1 // pred_region
      %1709 = dma.done [#allocation4], 128
    $region33: #{lstm_glove_forward.1} parent=1 // pred_fallthru
      _
    %1710 = vsyncpa [#allocation4], 1

</llo_original>
